<compile_context>
chip_gen: v7x
topology: tpu7x:2x2x1
jax: 0.10.0
libtpu: 0.0.40
codegen_flags: <defaults>
</compile_context>

<pallas_src>
import jax
import jax.numpy as jnp
from jax.experimental import pallas as pl
from jax.experimental.pallas import tpu as pltpu


_MATMUL_DTYPE = jnp.bfloat16     # MXU operand dtype (accumulation stays f32)


def _round_up(x, m):
    return (x + m - 1) // m * m


def _pick_time_block(L, Bp, Hp):
    """Largest 'nice' divisor of L whose gx + y blocks fit a VMEM budget."""
    budget = 8 * 1024 * 1024     # bytes for double-buffered gx + y blocks
    for cand in (32, 16, 8, 4, 2, 1):
        if L % cand != 0:
            continue
        blk_bytes = 2 * cand * Bp * (4 * Hp + Hp) * 4   # gx + y, x2 buffers
        if blk_bytes <= budget:
            return cand
    return 1


# ----------------------------------------------------------------------------
# Pallas kernel: sequential recurrence of ONE layer over time.
#   grid = (L // T_BLK,)   strictly sequential ("arbitrary")
#   gx_ref : (T_BLK, Bp, 4Hp) f32  precomputed x@W_i + b_i + b_h (permuted)
#   wh_ref : (Hp, 4Hp)        bf16 hidden->gates weights (permuted, padded)
#   h0/c0  : (Bp, Hp)         f32  initial state
#   y_ref  : (T_BLK, Bp, Hp)  f32  hidden output per timestep
#   cN_ref : (Bp, Hp)         f32  final cell state (written once, last step)
#   h_scr/c_scr : VMEM (Bp, Hp) f32 recurrent state carried across grid steps
# ----------------------------------------------------------------------------
def _lstm_recurrent_kernel(gx_ref, wh_ref, h0_ref, c0_ref,
                           y_ref, cN_ref, h_scr, c_scr):
    blk = pl.program_id(0)

    @pl.when(blk == 0)
    def _():
        h_scr[...] = h0_ref[...]
        c_scr[...] = c0_ref[...]

    t_blk = y_ref.shape[0]
    hp = h_scr.shape[-1]

    wh = wh_ref[...]             # (Hp, 4Hp) bf16, resident across the block
    h = h_scr[...]               # (Bp, Hp) f32 recurrent state (vreg carry)
    c = c_scr[...]

    # Short static inner loop over the block's timesteps (fully unrolled;
    # per-step loads/stores keep live ranges small).
    for t in range(t_blk):
        gates = gx_ref[t] + jnp.dot(h.astype(wh.dtype), wh,
                                    preferred_element_type=jnp.float32)
        # gate layout: [ i | f | o | z ]  -> one grouped sigmoid, one tanh
        sig = jax.nn.sigmoid(gates[:, :3 * hp])
        i_t = sig[:, 0 * hp:1 * hp]
        f_t = sig[:, 1 * hp:2 * hp]
        o_t = sig[:, 2 * hp:3 * hp]
        z_t = jnp.tanh(gates[:, 3 * hp:])
        c = f_t * c + i_t * z_t
        h = o_t * jnp.tanh(c)
        y_ref[t] = h

    # Spill the carried state to VMEM scratch once per block (not per step).
    h_scr[...] = h
    c_scr[...] = c

    # Final cell state: single write on the last grid step only.
    @pl.when(blk == pl.num_programs(0) - 1)
    def _():
        cN_ref[...] = c


def _run_lstm_layer(gx, wh_p, h0_p, c0_p, t_blk):
    """gx: (L, Bp, 4Hp) f32 | wh_p: (Hp, 4Hp) bf16 | h0/c0: (Bp, Hp) f32."""
    L, Bp, H4 = gx.shape
    Hp = H4 // 4
    n_blk = L // t_blk

    grid_spec = pltpu.PrefetchScalarGridSpec(
        num_scalar_prefetch=0,
        grid=(n_blk,),
        in_specs=[
            pl.BlockSpec((t_blk, Bp, H4), lambda b: (b, 0, 0)),   # gx block
            pl.BlockSpec((Hp, H4), lambda b: (0, 0)),             # W_h resident
            pl.BlockSpec((Bp, Hp), lambda b: (0, 0)),             # h0
            pl.BlockSpec((Bp, Hp), lambda b: (0, 0)),             # c0
        ],
        out_specs=(
            pl.BlockSpec((t_blk, Bp, Hp), lambda b: (b, 0, 0)),   # y block
            pl.BlockSpec((Bp, Hp), lambda b: (0, 0)),             # c_final
        ),
        scratch_shapes=[
            pltpu.VMEM((Bp, Hp), jnp.float32),   # h state
            pltpu.VMEM((Bp, Hp), jnp.float32),   # c state
        ],
    )
    # NOTE(v7x, 64 MiB VMEM): for very large H, tile W_h along 4H and/or cap
    # t_blk further; at these sizes the default VMEM budget is ample.
    return pl.pallas_call(
        _lstm_recurrent_kernel,
        out_shape=(
            jax.ShapeDtypeStruct((L, Bp, Hp), jnp.float32),
            jax.ShapeDtypeStruct((Bp, Hp), jnp.float32),
        ),
        grid_spec=grid_spec,
        compiler_params=pltpu.CompilerParams(
            dimension_semantics=("arbitrary",),   # time recurrence is serial
        ),
    )(gx, wh_p, h0_p, c0_p)


# ----------------------------------------------------------------------------
# Weight preprocessing: pad each gate from H -> Hp (multiple of 128) and
# permute the PyTorch gate order [i, f, z, o] -> kernel order [i, f, o, z].
# ----------------------------------------------------------------------------
def _prep_gate_matrix(W, H, Hp, d_in_pad=None):
    d_in = W.shape[0]
    Wr = W.reshape(d_in, 4, H)
    Wr = jnp.pad(Wr, ((0, 0), (0, 0), (0, Hp - H)))
    Wr = Wr[:, jnp.array([0, 1, 3, 2]), :]            # i,f,z,o -> i,f,o,z
    Wp = Wr.reshape(d_in, 4 * Hp)
    if d_in_pad is not None and d_in_pad > d_in:
        Wp = jnp.pad(Wp, ((0, d_in_pad - d_in), (0, 0)))
    return Wp


def _prep_gate_bias(b, H, Hp):
    br = b.reshape(4, H)
    br = jnp.pad(br, ((0, 0), (0, Hp - H)))
    br = br[jnp.array([0, 1, 3, 2]), :]
    return br.reshape(4 * Hp)


@jax.jit
def lstm_forward(x, params, h_0=None, c_0=None):
    """Mirrors LSTM.forward.

    x:      (B, L, input_size) float32
    params: list of (W_i, b_i, W_h, b_h) per layer (PyTorch layout/order)
    returns (output (B, L, H), (h_n (n_layers, B, H), c_n (n_layers, B, H)))
    """
    B, L, _ = x.shape
    n_layers = len(params)
    H = params[0][2].shape[0]
    Hp = _round_up(H, 128)       # lane-aligned hidden size
    Bp = _round_up(B, 8)         # sublane-aligned batch
    t_blk = _pick_time_block(L, Bp, Hp)

    if h_0 is None:
        h0_p = jnp.zeros((n_layers, Bp, Hp), jnp.float32)
    else:
        h0_p = jnp.pad(h_0.astype(jnp.float32),
                       ((0, 0), (0, Bp - B), (0, Hp - H)))
    if c_0 is None:
        c0_p = jnp.zeros((n_layers, Bp, Hp), jnp.float32)
    else:
        c0_p = jnp.pad(c_0.astype(jnp.float32),
                       ((0, 0), (0, Bp - B), (0, Hp - H)))

    # time-major, batch-padded layer input: (L, Bp, D_in)
    layer_in = jnp.pad(jnp.transpose(x, (1, 0, 2)).astype(jnp.float32),
                       ((0, 0), (0, Bp - B), (0, 0)))

    h_finals, c_finals = [], []
    # TODO(synk): fuse the per-layer loop into one pallas_call (wavefront over
    # (layer, time-block)) to avoid HBM round-trips of intermediate activations.
    for i, (W_i, b_i, W_h, b_h) in enumerate(params):
        d_in = layer_in.shape[-1]
        Wi_p = _prep_gate_matrix(W_i, H, Hp,
                                 d_in_pad=d_in if i > 0 else None)
        Wh_p = _prep_gate_matrix(W_h, H, Hp, d_in_pad=Hp)
        b_p = _prep_gate_bias(b_i + b_h, H, Hp)        # pre-summed biases

        # Hoisted input projection: one big (L*Bp, d_in) x (d_in, 4Hp) bf16
        # matmul for ALL timesteps (time-independent half of the gate math).
        lin2 = layer_in.reshape(L * Bp, d_in).astype(_MATMUL_DTYPE)
        gx = jnp.dot(lin2, Wi_p.astype(_MATMUL_DTYPE),
                     preferred_element_type=jnp.float32) + b_p
        gx = gx.reshape(L, Bp, 4 * Hp)

        y, c_f = _run_lstm_layer(gx, Wh_p.astype(_MATMUL_DTYPE),
                                 h0_p[i], c0_p[i], t_blk)
        layer_in = y
        h_finals.append(y[L - 1, :B, :H])     # final hidden = last timestep
        c_finals.append(c_f[:B, :H])

    output = jnp.transpose(layer_in[:, :B, :H], (1, 0, 2))   # back to (B, L, H)
    return output, (jnp.stack(h_finals, axis=0), jnp.stack(c_finals, axis=0))


# ----------------------------------------------------------------------------
# Parameter init (Xavier-normal, zero biases) and a pure-JAX f32 reference.
# ----------------------------------------------------------------------------
def _xavier_normal(key, fan_in, fan_out):
    std = (2.0 / (fan_in + fan_out)) ** 0.5
    return std * jax.random.normal(key, (fan_in, fan_out), jnp.float32)


def init_lstm_params(key, input_size, hidden_size, n_layers):
    params = []
    for i in range(n_layers):
        d_in = input_size if i == 0 else hidden_size
        key, k1, k2 = jax.random.split(key, 3)
        W_i = _xavier_normal(k1, d_in, 4 * hidden_size)
        b_i = jnp.zeros((4 * hidden_size,), jnp.float32)
        W_h = _xavier_normal(k2, hidden_size, 4 * hidden_size)
        b_h = jnp.zeros((4 * hidden_size,), jnp.float32)
        params.append((W_i, b_i, W_h, b_h))
    return params


def _reference_lstm(x, params):
    """Pure-JAX f32 reference matching the PyTorch semantics."""
    B, L, _ = x.shape
    n_layers = len(params)
    H = params[0][2].shape[0]
    h_t = [jnp.zeros((B, H), jnp.float32) for _ in range(n_layers)]
    c_t = [jnp.zeros((B, H), jnp.float32) for _ in range(n_layers)]
    outs = []
    for t in range(L):
        for i, (W_i, b_i, W_h, b_h) in enumerate(params):
            inp = x[:, t] if i == 0 else h_t[i - 1]
            g = inp @ W_i + b_i + h_t[i] @ W_h + b_h
            i_g, f_g, z_g, o_g = jnp.split(g, 4, axis=-1)
            i_g, f_g, o_g = map(jax.nn.sigmoid, (i_g, f_g, o_g))
            z_g = jnp.tanh(z_g)
            c_t[i] = f_g * c_t[i] + i_g * z_g
            h_t[i] = o_g * jnp.tanh(c_t[i])
        outs.append(h_t[-1])
    return (jnp.stack(outs, axis=1),
            (jnp.stack(h_t, axis=0), jnp.stack(c_t, axis=0)))


if __name__ == "__main__":
    B, L = 2, 8
    input_size, hidden_size, n_layers = 16, 32, 2

    key = jax.random.PRNGKey(0)
    key, kx = jax.random.split(key)
    x = jax.random.normal(kx, (B, L, input_size), jnp.float32)
    params = init_lstm_params(key, input_size, hidden_size, n_layers)

    out, (h_n, c_n) = lstm_forward(x, params)
    jax.block_until_ready((out, h_n, c_n))

    ref_out, (ref_h, ref_c) = _reference_lstm(x, params)
    assert out.shape == (B, L, hidden_size)
    assert h_n.shape == (n_layers, B, hidden_size)
    assert c_n.shape == (n_layers, B, hidden_size)
    # bf16 MXU operands (f32 accumulation) -> loosened tolerance vs f32 ref.
    assert jnp.allclose(out, ref_out, atol=2e-2, rtol=2e-2)
    assert jnp.allclose(h_n, ref_h, atol=2e-2, rtol=2e-2)
    assert jnp.allclose(c_n, ref_c, atol=2e-2, rtol=2e-2)

    print("KERNEL_OK")
</pallas_src>

<mosaic_0001>
module attributes {stable_mosaic.version = 11 : i64} {
  func.func @_lstm_recurrent_kernel(%arg0: i32, %arg1: memref<8x8x512xf32, #tpu.memory_space<vmem>>, %arg2: memref<128x512xbf16, #tpu.memory_space<vmem>>, %arg3: memref<8x128xf32, #tpu.memory_space<vmem>>, %arg4: memref<8x128xf32, #tpu.memory_space<vmem>>, %arg5: memref<8x8x128xf32, #tpu.memory_space<vmem>>, %arg6: memref<8x128xf32, #tpu.memory_space<vmem>>, %arg7: memref<8x128xf32, #tpu.memory_space<vmem>>, %arg8: memref<8x128xf32, #tpu.memory_space<vmem>>) attributes {dimension_semantics = [#tpu.dimension_semantics<arbitrary>], iteration_bounds = array<i64: 1>, scalar_prefetch = 0 : i64, scratch_operands = 2 : i64, tpu.core_type = #tpu.core_type<tc>, window_params = [{transform_indices = @transform_0, window_bounds = array<i64: 8, 8, 512>}, {pipeline_mode = #tpu.pipeline_mode<synchronous>, transform_indices = @transform_1, window_bounds = array<i64: 128, 512>}, {pipeline_mode = #tpu.pipeline_mode<synchronous>, transform_indices = @transform_2, window_bounds = array<i64: 8, 128>}, {pipeline_mode = #tpu.pipeline_mode<synchronous>, transform_indices = @transform_3, window_bounds = array<i64: 8, 128>}, {transform_indices = @transform_4, window_bounds = array<i64: 8, 8, 128>}, {pipeline_mode = #tpu.pipeline_mode<synchronous>, transform_indices = @transform_5, window_bounds = array<i64: 8, 128>}]} {
    %c0_i32 = arith.constant 0 : i32
    %0 = arith.cmpi eq, %arg0, %c0_i32 : i32
    %1 = arith.extui %0 : i1 to i32
    %c0_i32_0 = arith.constant 0 : i32
    %2 = arith.cmpi ne, %1, %c0_i32_0 : i32
    scf.if %2 {
      %c0_68 = arith.constant 0 : index
      %c0_69 = arith.constant 0 : index
      %203 = vector.load %arg3[%c0_68, %c0_69] : memref<8x128xf32, #tpu.memory_space<vmem>>, vector<8x128xf32>
      %c0_70 = arith.constant 0 : index
      %c0_71 = arith.constant 0 : index
      %204 = vector.load %arg7[%c0_70, %c0_71] : memref<8x128xf32, #tpu.memory_space<vmem>>, vector<8x128xf32>
      tpu.vector_store %arg7[%c0_70, %c0_71], %203 {strides = array<i32>} : memref<8x128xf32, #tpu.memory_space<vmem>>, vector<8x128xf32>,
      %c0_72 = arith.constant 0 : index
      %c0_73 = arith.constant 0 : index
      %205 = vector.load %arg4[%c0_72, %c0_73] : memref<8x128xf32, #tpu.memory_space<vmem>>, vector<8x128xf32>
      %c0_74 = arith.constant 0 : index
      %c0_75 = arith.constant 0 : index
      %206 = vector.load %arg8[%c0_74, %c0_75] : memref<8x128xf32, #tpu.memory_space<vmem>>, vector<8x128xf32>
      tpu.vector_store %arg8[%c0_74, %c0_75], %205 {strides = array<i32>} : memref<8x128xf32, #tpu.memory_space<vmem>>, vector<8x128xf32>,
    } else {
    }
    %c0 = arith.constant 0 : index
    %c0_1 = arith.constant 0 : index
    %3 = vector.load %arg2[%c0, %c0_1] : memref<128x512xbf16, #tpu.memory_space<vmem>>, vector<128x512xbf16>
    %c0_2 = arith.constant 0 : index
    %c0_3 = arith.constant 0 : index
    %4 = vector.load %arg7[%c0_2, %c0_3] : memref<8x128xf32, #tpu.memory_space<vmem>>, vector<8x128xf32>
    %c0_4 = arith.constant 0 : index
    %c0_5 = arith.constant 0 : index
    %5 = vector.load %arg8[%c0_4, %c0_5] : memref<8x128xf32, #tpu.memory_space<vmem>>, vector<8x128xf32>
    %c0_6 = arith.constant 0 : index
    %c0_7 = arith.constant 0 : index
    %c0_8 = arith.constant 0 : index
    %6 = vector.load %arg1[%c0_6, %c0_7, %c0_8] : memref<8x8x512xf32, #tpu.memory_space<vmem>>, vector<1x8x512xf32>
    %7 = vector.shape_cast %6 : vector<1x8x512xf32> to vector<8x512xf32>
    %8 = arith.truncf %4 : vector<8x128xf32> to vector<8x128xbf16>
    %cst = arith.constant dense<0.000000e+00> : vector<8x512xf32>
    %9 = tpu.matmul %8, %3, %cst {dimension_numbers = #tpu.dot_dimension_numbers<[1], [0], [0], [1], [0, 0, 1, 1], [], []>} : vector<8x128xbf16>, vector<128x512xbf16>, vector<8x512xf32> -> vector<8x512xf32>
    %10 = arith.addf %7, %9 : vector<8x512xf32>
    %11 = vector.extract_strided_slice %10 {offsets = [0, 0], sizes = [8, 384], strides = [1, 1]} : vector<8x512xf32> to vector<8x384xf32>
    %12 = arith.negf %11 : vector<8x384xf32>
    %13 = math.exp %12 : vector<8x384xf32>
    %cst_9 = arith.constant 1.000000e+00 : f32
    %14 = vector.broadcast %cst_9 : f32 to vector<8x384xf32>
    %15 = arith.addf %14, %13 : vector<8x384xf32>
    %16 = arith.divf %14, %15 : vector<8x384xf32>
    %17 = vector.extract_strided_slice %16 {offsets = [0, 0], sizes = [8, 128], strides = [1, 1]} : vector<8x384xf32> to vector<8x128xf32>
    %18 = vector.extract_strided_slice %16 {offsets = [0, 128], sizes = [8, 128], strides = [1, 1]} : vector<8x384xf32> to vector<8x128xf32>
    %19 = vector.extract_strided_slice %16 {offsets = [0, 256], sizes = [8, 128], strides = [1, 1]} : vector<8x384xf32> to vector<8x128xf32>
    %20 = vector.extract_strided_slice %10 {offsets = [0, 384], sizes = [8, 128], strides = [1, 1]} : vector<8x512xf32> to vector<8x128xf32>
    %21 = math.tanh %20 : vector<8x128xf32>
    %22 = arith.mulf %18, %5 : vector<8x128xf32>
    %23 = arith.mulf %17, %21 : vector<8x128xf32>
    %24 = arith.addf %22, %23 : vector<8x128xf32>
    %25 = math.tanh %24 : vector<8x128xf32>
    %26 = arith.mulf %19, %25 : vector<8x128xf32>
    %c0_10 = arith.constant 0 : index
    %c0_11 = arith.constant 0 : index
    %c0_12 = arith.constant 0 : index
    %27 = vector.load %arg5[%c0_10, %c0_11, %c0_12] : memref<8x8x128xf32, #tpu.memory_space<vmem>>, vector<1x8x128xf32>
    %28 = vector.shape_cast %27 : vector<1x8x128xf32> to vector<8x128xf32>
    %29 = vector.shape_cast %26 : vector<8x128xf32> to vector<1x8x128xf32>
    tpu.vector_store %arg5[%c0_10, %c0_11, %c0_12], %29 {strides = array<i32>} : memref<8x8x128xf32, #tpu.memory_space<vmem>>, vector<1x8x128xf32>,
    %c1 = arith.constant 1 : index
    %c0_13 = arith.constant 0 : index
    %c0_14 = arith.constant 0 : index
    %30 = vector.load %arg1[%c1, %c0_13, %c0_14] : memref<8x8x512xf32, #tpu.memory_space<vmem>>, vector<1x8x512xf32>
    %31 = vector.shape_cast %30 : vector<1x8x512xf32> to vector<8x512xf32>
    %32 = arith.truncf %26 : vector<8x128xf32> to vector<8x128xbf16>
    %cst_15 = arith.constant dense<0.000000e+00> : vector<8x512xf32>
    %33 = tpu.matmul %32, %3, %cst_15 {dimension_numbers = #tpu.dot_dimension_numbers<[1], [0], [0], [1], [0, 0, 1, 1], [], []>} : vector<8x128xbf16>, vector<128x512xbf16>, vector<8x512xf32> -> vector<8x512xf32>
    %34 = arith.addf %31, %33 : vector<8x512xf32>
    %35 = vector.extract_strided_slice %34 {offsets = [0, 0], sizes = [8, 384], strides = [1, 1]} : vector<8x512xf32> to vector<8x384xf32>
    %36 = arith.negf %35 : vector<8x384xf32>
    %37 = math.exp %36 : vector<8x384xf32>
    %cst_16 = arith.constant 1.000000e+00 : f32
    %38 = vector.broadcast %cst_16 : f32 to vector<8x384xf32>
    %39 = arith.addf %38, %37 : vector<8x384xf32>
    %40 = arith.divf %38, %39 : vector<8x384xf32>
    %41 = vector.extract_strided_slice %40 {offsets = [0, 0], sizes = [8, 128], strides = [1, 1]} : vector<8x384xf32> to vector<8x128xf32>
    %42 = vector.extract_strided_slice %40 {offsets = [0, 128], sizes = [8, 128], strides = [1, 1]} : vector<8x384xf32> to vector<8x128xf32>
    %43 = vector.extract_strided_slice %40 {offsets = [0, 256], sizes = [8, 128], strides = [1, 1]} : vector<8x384xf32> to vector<8x128xf32>
    %44 = vector.extract_strided_slice %34 {offsets = [0, 384], sizes = [8, 128], strides = [1, 1]} : vector<8x512xf32> to vector<8x128xf32>
    %45 = math.tanh %44 : vector<8x128xf32>
    %46 = arith.mulf %42, %24 : vector<8x128xf32>
    %47 = arith.mulf %41, %45 : vector<8x128xf32>
    %48 = arith.addf %46, %47 : vector<8x128xf32>
    %49 = math.tanh %48 : vector<8x128xf32>
    %50 = arith.mulf %43, %49 : vector<8x128xf32>
    %c1_17 = arith.constant 1 : index
    %c0_18 = arith.constant 0 : index
    %c0_19 = arith.constant 0 : index
    %51 = vector.load %arg5[%c1_17, %c0_18, %c0_19] : memref<8x8x128xf32, #tpu.memory_space<vmem>>, vector<1x8x128xf32>
    %52 = vector.shape_cast %51 : vector<1x8x128xf32> to vector<8x128xf32>
    %53 = vector.shape_cast %50 : vector<8x128xf32> to vector<1x8x128xf32>
    tpu.vector_store %arg5[%c1_17, %c0_18, %c0_19], %53 {strides = array<i32>} : memref<8x8x128xf32, #tpu.memory_space<vmem>>, vector<1x8x128xf32>,
    %c2 = arith.constant 2 : index
    %c0_20 = arith.constant 0 : index
    %c0_21 = arith.constant 0 : index
    %54 = vector.load %arg1[%c2, %c0_20, %c0_21] : memref<8x8x512xf32, #tpu.memory_space<vmem>>, vector<1x8x512xf32>
    %55 = vector.shape_cast %54 : vector<1x8x512xf32> to vector<8x512xf32>
    %56 = arith.truncf %50 : vector<8x128xf32> to vector<8x128xbf16>
    %cst_22 = arith.constant dense<0.000000e+00> : vector<8x512xf32>
    %57 = tpu.matmul %56, %3, %cst_22 {dimension_numbers = #tpu.dot_dimension_numbers<[1], [0], [0], [1], [0, 0, 1, 1], [], []>} : vector<8x128xbf16>, vector<128x512xbf16>, vector<8x512xf32> -> vector<8x512xf32>
    %58 = arith.addf %55, %57 : vector<8x512xf32>
    %59 = vector.extract_strided_slice %58 {offsets = [0, 0], sizes = [8, 384], strides = [1, 1]} : vector<8x512xf32> to vector<8x384xf32>
    %60 = arith.negf %59 : vector<8x384xf32>
    %61 = math.exp %60 : vector<8x384xf32>
    %cst_23 = arith.constant 1.000000e+00 : f32
    %62 = vector.broadcast %cst_23 : f32 to vector<8x384xf32>
    %63 = arith.addf %62, %61 : vector<8x384xf32>
    %64 = arith.divf %62, %63 : vector<8x384xf32>
    %65 = vector.extract_strided_slice %64 {offsets = [0, 0], sizes = [8, 128], strides = [1, 1]} : vector<8x384xf32> to vector<8x128xf32>
    %66 = vector.extract_strided_slice %64 {offsets = [0, 128], sizes = [8, 128], strides = [1, 1]} : vector<8x384xf32> to vector<8x128xf32>
    %67 = vector.extract_strided_slice %64 {offsets = [0, 256], sizes = [8, 128], strides = [1, 1]} : vector<8x384xf32> to vector<8x128xf32>
    %68 = vector.extract_strided_slice %58 {offsets = [0, 384], sizes = [8, 128], strides = [1, 1]} : vector<8x512xf32> to vector<8x128xf32>
    %69 = math.tanh %68 : vector<8x128xf32>
    %70 = arith.mulf %66, %48 : vector<8x128xf32>
    %71 = arith.mulf %65, %69 : vector<8x128xf32>
    %72 = arith.addf %70, %71 : vector<8x128xf32>
    %73 = math.tanh %72 : vector<8x128xf32>
    %74 = arith.mulf %67, %73 : vector<8x128xf32>
    %c2_24 = arith.constant 2 : index
    %c0_25 = arith.constant 0 : index
    %c0_26 = arith.constant 0 : index
    %75 = vector.load %arg5[%c2_24, %c0_25, %c0_26] : memref<8x8x128xf32, #tpu.memory_space<vmem>>, vector<1x8x128xf32>
    %76 = vector.shape_cast %75 : vector<1x8x128xf32> to vector<8x128xf32>
    %77 = vector.shape_cast %74 : vector<8x128xf32> to vector<1x8x128xf32>
    tpu.vector_store %arg5[%c2_24, %c0_25, %c0_26], %77 {strides = array<i32>} : memref<8x8x128xf32, #tpu.memory_space<vmem>>, vector<1x8x128xf32>,
    %c3 = arith.constant 3 : index
    %c0_27 = arith.constant 0 : index
    %c0_28 = arith.constant 0 : index
    %78 = vector.load %arg1[%c3, %c0_27, %c0_28] : memref<8x8x512xf32, #tpu.memory_space<vmem>>, vector<1x8x512xf32>
    %79 = vector.shape_cast %78 : vector<1x8x512xf32> to vector<8x512xf32>
    %80 = arith.truncf %74 : vector<8x128xf32> to vector<8x128xbf16>
    %cst_29 = arith.constant dense<0.000000e+00> : vector<8x512xf32>
    %81 = tpu.matmul %80, %3, %cst_29 {dimension_numbers = #tpu.dot_dimension_numbers<[1], [0], [0], [1], [0, 0, 1, 1], [], []>} : vector<8x128xbf16>, vector<128x512xbf16>, vector<8x512xf32> -> vector<8x512xf32>
    %82 = arith.addf %79, %81 : vector<8x512xf32>
    %83 = vector.extract_strided_slice %82 {offsets = [0, 0], sizes = [8, 384], strides = [1, 1]} : vector<8x512xf32> to vector<8x384xf32>
    %84 = arith.negf %83 : vector<8x384xf32>
    %85 = math.exp %84 : vector<8x384xf32>
    %cst_30 = arith.constant 1.000000e+00 : f32
    %86 = vector.broadcast %cst_30 : f32 to vector<8x384xf32>
    %87 = arith.addf %86, %85 : vector<8x384xf32>
    %88 = arith.divf %86, %87 : vector<8x384xf32>
    %89 = vector.extract_strided_slice %88 {offsets = [0, 0], sizes = [8, 128], strides = [1, 1]} : vector<8x384xf32> to vector<8x128xf32>
    %90 = vector.extract_strided_slice %88 {offsets = [0, 128], sizes = [8, 128], strides = [1, 1]} : vector<8x384xf32> to vector<8x128xf32>
    %91 = vector.extract_strided_slice %88 {offsets = [0, 256], sizes = [8, 128], strides = [1, 1]} : vector<8x384xf32> to vector<8x128xf32>
    %92 = vector.extract_strided_slice %82 {offsets = [0, 384], sizes = [8, 128], strides = [1, 1]} : vector<8x512xf32> to vector<8x128xf32>
    %93 = math.tanh %92 : vector<8x128xf32>
    %94 = arith.mulf %90, %72 : vector<8x128xf32>
    %95 = arith.mulf %89, %93 : vector<8x128xf32>
    %96 = arith.addf %94, %95 : vector<8x128xf32>
    %97 = math.tanh %96 : vector<8x128xf32>
    %98 = arith.mulf %91, %97 : vector<8x128xf32>
    %c3_31 = arith.constant 3 : index
    %c0_32 = arith.constant 0 : index
    %c0_33 = arith.constant 0 : index
    %99 = vector.load %arg5[%c3_31, %c0_32, %c0_33] : memref<8x8x128xf32, #tpu.memory_space<vmem>>, vector<1x8x128xf32>
    %100 = vector.shape_cast %99 : vector<1x8x128xf32> to vector<8x128xf32>
    %101 = vector.shape_cast %98 : vector<8x128xf32> to vector<1x8x128xf32>
    tpu.vector_store %arg5[%c3_31, %c0_32, %c0_33], %101 {strides = array<i32>} : memref<8x8x128xf32, #tpu.memory_space<vmem>>, vector<1x8x128xf32>,
    %c4 = arith.constant 4 : index
    %c0_34 = arith.constant 0 : index
    %c0_35 = arith.constant 0 : index
    %102 = vector.load %arg1[%c4, %c0_34, %c0_35] : memref<8x8x512xf32, #tpu.memory_space<vmem>>, vector<1x8x512xf32>
    %103 = vector.shape_cast %102 : vector<1x8x512xf32> to vector<8x512xf32>
    %104 = arith.truncf %98 : vector<8x128xf32> to vector<8x128xbf16>
    %cst_36 = arith.constant dense<0.000000e+00> : vector<8x512xf32>
    %105 = tpu.matmul %104, %3, %cst_36 {dimension_numbers = #tpu.dot_dimension_numbers<[1], [0], [0], [1], [0, 0, 1, 1], [], []>} : vector<8x128xbf16>, vector<128x512xbf16>, vector<8x512xf32> -> vector<8x512xf32>
    %106 = arith.addf %103, %105 : vector<8x512xf32>
    %107 = vector.extract_strided_slice %106 {offsets = [0, 0], sizes = [8, 384], strides = [1, 1]} : vector<8x512xf32> to vector<8x384xf32>
    %108 = arith.negf %107 : vector<8x384xf32>
    %109 = math.exp %108 : vector<8x384xf32>
    %cst_37 = arith.constant 1.000000e+00 : f32
    %110 = vector.broadcast %cst_37 : f32 to vector<8x384xf32>
    %111 = arith.addf %110, %109 : vector<8x384xf32>
    %112 = arith.divf %110, %111 : vector<8x384xf32>
    %113 = vector.extract_strided_slice %112 {offsets = [0, 0], sizes = [8, 128], strides = [1, 1]} : vector<8x384xf32> to vector<8x128xf32>
    %114 = vector.extract_strided_slice %112 {offsets = [0, 128], sizes = [8, 128], strides = [1, 1]} : vector<8x384xf32> to vector<8x128xf32>
    %115 = vector.extract_strided_slice %112 {offsets = [0, 256], sizes = [8, 128], strides = [1, 1]} : vector<8x384xf32> to vector<8x128xf32>
    %116 = vector.extract_strided_slice %106 {offsets = [0, 384], sizes = [8, 128], strides = [1, 1]} : vector<8x512xf32> to vector<8x128xf32>
    %117 = math.tanh %116 : vector<8x128xf32>
    %118 = arith.mulf %114, %96 : vector<8x128xf32>
    %119 = arith.mulf %113, %117 : vector<8x128xf32>
    %120 = arith.addf %118, %119 : vector<8x128xf32>
    %121 = math.tanh %120 : vector<8x128xf32>
    %122 = arith.mulf %115, %121 : vector<8x128xf32>
    %c4_38 = arith.constant 4 : index
    %c0_39 = arith.constant 0 : index
    %c0_40 = arith.constant 0 : index
    %123 = vector.load %arg5[%c4_38, %c0_39, %c0_40] : memref<8x8x128xf32, #tpu.memory_space<vmem>>, vector<1x8x128xf32>
    %124 = vector.shape_cast %123 : vector<1x8x128xf32> to vector<8x128xf32>
    %125 = vector.shape_cast %122 : vector<8x128xf32> to vector<1x8x128xf32>
    tpu.vector_store %arg5[%c4_38, %c0_39, %c0_40], %125 {strides = array<i32>} : memref<8x8x128xf32, #tpu.memory_space<vmem>>, vector<1x8x128xf32>,
    %c5 = arith.constant 5 : index
    %c0_41 = arith.constant 0 : index
    %c0_42 = arith.constant 0 : index
    %126 = vector.load %arg1[%c5, %c0_41, %c0_42] : memref<8x8x512xf32, #tpu.memory_space<vmem>>, vector<1x8x512xf32>
    %127 = vector.shape_cast %126 : vector<1x8x512xf32> to vector<8x512xf32>
    %128 = arith.truncf %122 : vector<8x128xf32> to vector<8x128xbf16>
    %cst_43 = arith.constant dense<0.000000e+00> : vector<8x512xf32>
    %129 = tpu.matmul %128, %3, %cst_43 {dimension_numbers = #tpu.dot_dimension_numbers<[1], [0], [0], [1], [0, 0, 1, 1], [], []>} : vector<8x128xbf16>, vector<128x512xbf16>, vector<8x512xf32> -> vector<8x512xf32>
    %130 = arith.addf %127, %129 : vector<8x512xf32>
    %131 = vector.extract_strided_slice %130 {offsets = [0, 0], sizes = [8, 384], strides = [1, 1]} : vector<8x512xf32> to vector<8x384xf32>
    %132 = arith.negf %131 : vector<8x384xf32>
    %133 = math.exp %132 : vector<8x384xf32>
    %cst_44 = arith.constant 1.000000e+00 : f32
    %134 = vector.broadcast %cst_44 : f32 to vector<8x384xf32>
    %135 = arith.addf %134, %133 : vector<8x384xf32>
    %136 = arith.divf %134, %135 : vector<8x384xf32>
    %137 = vector.extract_strided_slice %136 {offsets = [0, 0], sizes = [8, 128], strides = [1, 1]} : vector<8x384xf32> to vector<8x128xf32>
    %138 = vector.extract_strided_slice %136 {offsets = [0, 128], sizes = [8, 128], strides = [1, 1]} : vector<8x384xf32> to vector<8x128xf32>
    %139 = vector.extract_strided_slice %136 {offsets = [0, 256], sizes = [8, 128], strides = [1, 1]} : vector<8x384xf32> to vector<8x128xf32>
    %140 = vector.extract_strided_slice %130 {offsets = [0, 384], sizes = [8, 128], strides = [1, 1]} : vector<8x512xf32> to vector<8x128xf32>
    %141 = math.tanh %140 : vector<8x128xf32>
    %142 = arith.mulf %138, %120 : vector<8x128xf32>
    %143 = arith.mulf %137, %141 : vector<8x128xf32>
    %144 = arith.addf %142, %143 : vector<8x128xf32>
    %145 = math.tanh %144 : vector<8x128xf32>
    %146 = arith.mulf %139, %145 : vector<8x128xf32>
    %c5_45 = arith.constant 5 : index
    %c0_46 = arith.constant 0 : index
    %c0_47 = arith.constant 0 : index
    %147 = vector.load %arg5[%c5_45, %c0_46, %c0_47] : memref<8x8x128xf32, #tpu.memory_space<vmem>>, vector<1x8x128xf32>
    %148 = vector.shape_cast %147 : vector<1x8x128xf32> to vector<8x128xf32>
    %149 = vector.shape_cast %146 : vector<8x128xf32> to vector<1x8x128xf32>
    tpu.vector_store %arg5[%c5_45, %c0_46, %c0_47], %149 {strides = array<i32>} : memref<8x8x128xf32, #tpu.memory_space<vmem>>, vector<1x8x128xf32>,
    %c6 = arith.constant 6 : index
    %c0_48 = arith.constant 0 : index
    %c0_49 = arith.constant 0 : index
    %150 = vector.load %arg1[%c6, %c0_48, %c0_49] : memref<8x8x512xf32, #tpu.memory_space<vmem>>, vector<1x8x512xf32>
    %151 = vector.shape_cast %150 : vector<1x8x512xf32> to vector<8x512xf32>
    %152 = arith.truncf %146 : vector<8x128xf32> to vector<8x128xbf16>
    %cst_50 = arith.constant dense<0.000000e+00> : vector<8x512xf32>
    %153 = tpu.matmul %152, %3, %cst_50 {dimension_numbers = #tpu.dot_dimension_numbers<[1], [0], [0], [1], [0, 0, 1, 1], [], []>} : vector<8x128xbf16>, vector<128x512xbf16>, vector<8x512xf32> -> vector<8x512xf32>
    %154 = arith.addf %151, %153 : vector<8x512xf32>
    %155 = vector.extract_strided_slice %154 {offsets = [0, 0], sizes = [8, 384], strides = [1, 1]} : vector<8x512xf32> to vector<8x384xf32>
    %156 = arith.negf %155 : vector<8x384xf32>
    %157 = math.exp %156 : vector<8x384xf32>
    %cst_51 = arith.constant 1.000000e+00 : f32
    %158 = vector.broadcast %cst_51 : f32 to vector<8x384xf32>
    %159 = arith.addf %158, %157 : vector<8x384xf32>
    %160 = arith.divf %158, %159 : vector<8x384xf32>
    %161 = vector.extract_strided_slice %160 {offsets = [0, 0], sizes = [8, 128], strides = [1, 1]} : vector<8x384xf32> to vector<8x128xf32>
    %162 = vector.extract_strided_slice %160 {offsets = [0, 128], sizes = [8, 128], strides = [1, 1]} : vector<8x384xf32> to vector<8x128xf32>
    %163 = vector.extract_strided_slice %160 {offsets = [0, 256], sizes = [8, 128], strides = [1, 1]} : vector<8x384xf32> to vector<8x128xf32>
    %164 = vector.extract_strided_slice %154 {offsets = [0, 384], sizes = [8, 128], strides = [1, 1]} : vector<8x512xf32> to vector<8x128xf32>
    %165 = math.tanh %164 : vector<8x128xf32>
    %166 = arith.mulf %162, %144 : vector<8x128xf32>
    %167 = arith.mulf %161, %165 : vector<8x128xf32>
    %168 = arith.addf %166, %167 : vector<8x128xf32>
    %169 = math.tanh %168 : vector<8x128xf32>
    %170 = arith.mulf %163, %169 : vector<8x128xf32>
    %c6_52 = arith.constant 6 : index
    %c0_53 = arith.constant 0 : index
    %c0_54 = arith.constant 0 : index
    %171 = vector.load %arg5[%c6_52, %c0_53, %c0_54] : memref<8x8x128xf32, #tpu.memory_space<vmem>>, vector<1x8x128xf32>
    %172 = vector.shape_cast %171 : vector<1x8x128xf32> to vector<8x128xf32>
    %173 = vector.shape_cast %170 : vector<8x128xf32> to vector<1x8x128xf32>
    tpu.vector_store %arg5[%c6_52, %c0_53, %c0_54], %173 {strides = array<i32>} : memref<8x8x128xf32, #tpu.memory_space<vmem>>, vector<1x8x128xf32>,
    %c7 = arith.constant 7 : index
    %c0_55 = arith.constant 0 : index
    %c0_56 = arith.constant 0 : index
    %174 = vector.load %arg1[%c7, %c0_55, %c0_56] : memref<8x8x512xf32, #tpu.memory_space<vmem>>, vector<1x8x512xf32>
    %175 = vector.shape_cast %174 : vector<1x8x512xf32> to vector<8x512xf32>
    %176 = arith.truncf %170 : vector<8x128xf32> to vector<8x128xbf16>
    %cst_57 = arith.constant dense<0.000000e+00> : vector<8x512xf32>
    %177 = tpu.matmul %176, %3, %cst_57 {dimension_numbers = #tpu.dot_dimension_numbers<[1], [0], [0], [1], [0, 0, 1, 1], [], []>} : vector<8x128xbf16>, vector<128x512xbf16>, vector<8x512xf32> -> vector<8x512xf32>
    %178 = arith.addf %175, %177 : vector<8x512xf32>
    %179 = vector.extract_strided_slice %178 {offsets = [0, 0], sizes = [8, 384], strides = [1, 1]} : vector<8x512xf32> to vector<8x384xf32>
    %180 = arith.negf %179 : vector<8x384xf32>
    %181 = math.exp %180 : vector<8x384xf32>
    %cst_58 = arith.constant 1.000000e+00 : f32
    %182 = vector.broadcast %cst_58 : f32 to vector<8x384xf32>
    %183 = arith.addf %182, %181 : vector<8x384xf32>
    %184 = arith.divf %182, %183 : vector<8x384xf32>
    %185 = vector.extract_strided_slice %184 {offsets = [0, 0], sizes = [8, 128], strides = [1, 1]} : vector<8x384xf32> to vector<8x128xf32>
    %186 = vector.extract_strided_slice %184 {offsets = [0, 128], sizes = [8, 128], strides = [1, 1]} : vector<8x384xf32> to vector<8x128xf32>
    %187 = vector.extract_strided_slice %184 {offsets = [0, 256], sizes = [8, 128], strides = [1, 1]} : vector<8x384xf32> to vector<8x128xf32>
    %188 = vector.extract_strided_slice %178 {offsets = [0, 384], sizes = [8, 128], strides = [1, 1]} : vector<8x512xf32> to vector<8x128xf32>
    %189 = math.tanh %188 : vector<8x128xf32>
    %190 = arith.mulf %186, %168 : vector<8x128xf32>
    %191 = arith.mulf %185, %189 : vector<8x128xf32>
    %192 = arith.addf %190, %191 : vector<8x128xf32>
    %193 = math.tanh %192 : vector<8x128xf32>
    %194 = arith.mulf %187, %193 : vector<8x128xf32>
    %c7_59 = arith.constant 7 : index
    %c0_60 = arith.constant 0 : index
    %c0_61 = arith.constant 0 : index
    %195 = vector.load %arg5[%c7_59, %c0_60, %c0_61] : memref<8x8x128xf32, #tpu.memory_space<vmem>>, vector<1x8x128xf32>
    %196 = vector.shape_cast %195 : vector<1x8x128xf32> to vector<8x128xf32>
    %197 = vector.shape_cast %194 : vector<8x128xf32> to vector<1x8x128xf32>
    tpu.vector_store %arg5[%c7_59, %c0_60, %c0_61], %197 {strides = array<i32>} : memref<8x8x128xf32, #tpu.memory_space<vmem>>, vector<1x8x128xf32>,
    %c0_62 = arith.constant 0 : index
    %c0_63 = arith.constant 0 : index
    %198 = vector.load %arg7[%c0_62, %c0_63] : memref<8x128xf32, #tpu.memory_space<vmem>>, vector<8x128xf32>
    tpu.vector_store %arg7[%c0_62, %c0_63], %194 {strides = array<i32>} : memref<8x128xf32, #tpu.memory_space<vmem>>, vector<8x128xf32>,
    %c0_64 = arith.constant 0 : index
    %c0_65 = arith.constant 0 : index
    %199 = vector.load %arg8[%c0_64, %c0_65] : memref<8x128xf32, #tpu.memory_space<vmem>>, vector<8x128xf32>
    tpu.vector_store %arg8[%c0_64, %c0_65], %192 {strides = array<i32>} : memref<8x128xf32, #tpu.memory_space<vmem>>, vector<8x128xf32>,
    %c0_i32_66 = arith.constant 0 : i32
    %200 = arith.cmpi eq, %arg0, %c0_i32_66 : i32
    %201 = arith.extui %200 : i1 to i32
    %c0_i32_67 = arith.constant 0 : i32
    %202 = arith.cmpi ne, %201, %c0_i32_67 : i32
    scf.if %202 {
      %c0_68 = arith.constant 0 : index
      %c0_69 = arith.constant 0 : index
      %203 = vector.load %arg6[%c0_68, %c0_69] : memref<8x128xf32, #tpu.memory_space<vmem>>, vector<8x128xf32>
      tpu.vector_store %arg6[%c0_68, %c0_69], %192 {strides = array<i32>} : memref<8x128xf32, #tpu.memory_space<vmem>>, vector<8x128xf32>,
    } else {
    }
    return
  }
  func.func @transform_0(%arg0: i32) -> (i32, i32, i32) {
    %c0_i32 = arith.constant 0 : i32
    %c0_i32_0 = arith.constant 0 : i32
    %c0_i32_1 = arith.constant 0 : i32
    return %arg0, %c0_i32, %c0_i32_0 : i32, i32, i32
  }
  func.func @transform_1(%arg0: i32) -> (i32, i32) {
    %c0_i32 = arith.constant 0 : i32
    %c0_i32_0 = arith.constant 0 : i32
    %c0_i32_1 = arith.constant 0 : i32
    return %c0_i32, %c0_i32_0 : i32, i32
  }
  func.func @transform_2(%arg0: i32) -> (i32, i32) {
    %c0_i32 = arith.constant 0 : i32
    %c0_i32_0 = arith.constant 0 : i32
    %c0_i32_1 = arith.constant 0 : i32
    return %c0_i32, %c0_i32_0 : i32, i32
  }
  func.func @transform_3(%arg0: i32) -> (i32, i32) {
    %c0_i32 = arith.constant 0 : i32
    %c0_i32_0 = arith.constant 0 : i32
    %c0_i32_1 = arith.constant 0 : i32
    return %c0_i32, %c0_i32_0 : i32, i32
  }
  func.func @transform_4(%arg0: i32) -> (i32, i32, i32) {
    %c0_i32 = arith.constant 0 : i32
    %c0_i32_0 = arith.constant 0 : i32
    %c0_i32_1 = arith.constant 0 : i32
    return %arg0, %c0_i32, %c0_i32_0 : i32, i32, i32
  }
  func.func @transform_5(%arg0: i32) -> (i32, i32) {
    %c0_i32 = arith.constant 0 : i32
    %c0_i32_0 = arith.constant 0 : i32
    %c0_i32_1 = arith.constant 0 : i32
    return %c0_i32, %c0_i32_0 : i32, i32
  }
}

</mosaic_0001>

<llo_original>
// kernel: lstm_forward.2
$region0: #{lstm_forward.2}
  #allocation0 [shape = 'u32[]', space=smem, size = 0x4, offset = 0x4, fixed_abs, tag = 'smem constant byte address 0x4 - core index']
  #allocation1 [shape = 'u32[144,128]{1,0:T(1,128)}', space=vmem, size = 0x12000, scoped, tag = 'internal scratch']
  #allocation2 [shape = 'f32[8,128]{1,0:T(8,128)}', space=vmem, size = 0x1000, scoped, tag = 'scratch operand']
  #allocation3 [shape = 'f32[8,128]{1,0:T(8,128)}', space=vmem, size = 0x1000, scoped, tag = 'scratch operand']
  %s0 = inlined_call_operand.vmem [shape: f32[8,8,512], index: 0, kind: input, shape index: {}]
  %s1 = inlined_call_operand.vmem [shape: bf16[128,512], index: 1, kind: input, shape index: {}]
  %s2 = inlined_call_operand.vmem [shape: f32[8,128], index: 2, kind: input, shape index: {}, may-alias: {2,3}]
  %s3 = inlined_call_operand.vmem [shape: f32[8,128], index: 3, kind: input, shape index: {}, may-alias: {2,3}]
  %s4 = inlined_call_operand.vmem [shape: f32[8,8,128], index: 4, kind: output, shape index: {0}]
  %s5 = inlined_call_operand.vmem [shape: f32[8,128], index: 5, kind: output, shape index: {1}]
  %6 = xla_tuple %s4, %s5
  %s7 = sld [smem:[#allocation0]]
  $region42: #{lstm_forward.2} parent=0
    _
  %s9 = ssub.s32 1, %s7
  %s10 = scalar_select 0, %s9, %s7
  // Predicated region
  $region2: #{lstm_forward.2} parent=0 // pred_check
    _
  $region3: #{lstm_forward.2} parent=0 // pred_check_branch
    %12 = sbr.rel (0) target = $region5
  $region4: #{lstm_forward.2} parent=0 // pred_region
    _
  $region5: #{lstm_forward.2} parent=0 // pred_fallthru
    _
  // Predicated region
  $region6: #{lstm_forward.2} parent=0 // pred_check
    _
  $region7: #{lstm_forward.2} parent=0 // pred_check_branch
    %14 = sbr.rel (0) target = $region9
  $region8: #{lstm_forward.2} parent=0 // pred_region
    _
  $region9: #{lstm_forward.2} parent=0 // pred_fallthru
    _
  // Predicated region
  $region10: #{lstm_forward.2} parent=0 // pred_check
    _
  $region11: #{lstm_forward.2} parent=0 // pred_check_branch
    %16 = sbr.rel (0) target = $region13
  $region12: #{lstm_forward.2} parent=0 // pred_region
    _
  $region13: #{lstm_forward.2} parent=0 // pred_fallthru
    _
  // Predicated region
  $region14: #{lstm_forward.2} parent=0 // pred_check
    _
  $region15: #{lstm_forward.2} parent=0 // pred_check_branch
    %18 = sbr.rel (0) target = $region17
  $region16: #{lstm_forward.2} parent=0 // pred_region
    _
  $region17: #{lstm_forward.2} parent=0 // pred_fallthru
    _
  %p20 = scmp.eq.s32.totalorder 0, 0
  // Predicated region
  $region18: #{lstm_forward.2} parent=0 // pred_check
    %p21 = pneg %p20
  $region19: #{lstm_forward.2} parent=0 // pred_check_branch
    %23 = sbr.rel (%p21) target = $region21
  $region20: #{lstm_forward.2} parent=0 // pred_region
    %v24 = vld [vmem:[%s2] sm:$0xff]
    %25 = vst [vmem:[#allocation2] sm:$0xff] %v24
    %v26 = vld [vmem:[%s3] sm:$0xff]
    %27 = vst [vmem:[#allocation3] sm:$0xff] %v26
  $region21: #{lstm_forward.2} parent=0 // pred_fallthru
    _
  %v28 = vld [vmem:[%s1] sm:$0xff]
  %v29 = vld [vmem:[%s1 + $0x8] sm:$0xff]
  %v30 = vld [vmem:[%s1 + $0x10] sm:$0xff]
  %v31 = vld [vmem:[%s1 + $0x18] sm:$0xff]
  %v32 = vld [vmem:[%s1 + $0x20] sm:$0xff]
  %v33 = vld [vmem:[%s1 + $0x28] sm:$0xff]
  %v34 = vld [vmem:[%s1 + $0x30] sm:$0xff]
  %v35 = vld [vmem:[%s1 + $0x38] sm:$0xff]
  %v36 = vld [vmem:[%s1 + $0x40] sm:$0xff]
  %v37 = vld [vmem:[%s1 + $0x48] sm:$0xff]
  %v38 = vld [vmem:[%s1 + $0x50] sm:$0xff]
  %v39 = vld [vmem:[%s1 + $0x58] sm:$0xff]
  %v40 = vld [vmem:[%s1 + $0x60] sm:$0xff]
  %v41 = vld [vmem:[%s1 + $0x68] sm:$0xff]
  %v42 = vld [vmem:[%s1 + $0x70] sm:$0xff]
  %v43 = vld [vmem:[%s1 + $0x78] sm:$0xff]
  %v44 = vld [vmem:[%s1 + $0x80] sm:$0xff]
  %v45 = vld [vmem:[%s1 + $0x88] sm:$0xff]
  %v46 = vld [vmem:[%s1 + $0x90] sm:$0xff]
  %v47 = vld [vmem:[%s1 + $0x98] sm:$0xff]
  %v48 = vld [vmem:[%s1 + $0xa0] sm:$0xff]
  %v49 = vld [vmem:[%s1 + $0xa8] sm:$0xff]
  %v50 = vld [vmem:[%s1 + $0xb0] sm:$0xff]
  %v51 = vld [vmem:[%s1 + $0xb8] sm:$0xff]
  %v52 = vld [vmem:[%s1 + $0xc0] sm:$0xff]
  %v53 = vld [vmem:[%s1 + $0xc8] sm:$0xff]
  %v54 = vld [vmem:[%s1 + $0xd0] sm:$0xff]
  %v55 = vld [vmem:[%s1 + $0xd8] sm:$0xff]
  %v56 = vld [vmem:[%s1 + $0xe0] sm:$0xff]
  %v57 = vld [vmem:[%s1 + $0xe8] sm:$0xff]
  %v58 = vld [vmem:[%s1 + $0xf0] sm:$0xff]
  %v59 = vld [vmem:[%s1 + $0xf8] sm:$0xff]
  %v60 = vld [vmem:[#allocation2] sm:$0xff]
  %v61 = vld [vmem:[#allocation3] sm:$0xff]
  %v62 = vld [vmem:[%s0] sm:$0xff]
  %v63 = vld [vmem:[%s0 + $0x8] sm:$0xff]
  %v64 = vld [vmem:[%s0 + $0x10] sm:$0xff]
  %v65 = vld [vmem:[%s0 + $0x18] sm:$0xff]
  %v66 = vpack.c.bf16 %v60, %v60
  %v99 = vunpack.c.l.b16 %v28
  %v100 = vunpack.c.h.b16 %v28
  %v101 = vunpack.c.l.b16 %v29
  %v102 = vunpack.c.h.b16 %v29
  %v103 = vunpack.c.l.b16 %v30
  %v104 = vunpack.c.h.b16 %v30
  %v105 = vunpack.c.l.b16 %v31
  %v106 = vunpack.c.h.b16 %v31
  %v107 = vunpack.c.l.b16 %v32
  %v108 = vunpack.c.h.b16 %v32
  %v109 = vunpack.c.l.b16 %v33
  %v110 = vunpack.c.h.b16 %v33
  %v111 = vunpack.c.l.b16 %v34
  %v112 = vunpack.c.h.b16 %v34
  %v113 = vunpack.c.l.b16 %v35
  %v114 = vunpack.c.h.b16 %v35
  %v115 = vunpack.c.l.b16 %v36
  %v116 = vunpack.c.h.b16 %v36
  %v117 = vunpack.c.l.b16 %v37
  %v118 = vunpack.c.h.b16 %v37
  %v119 = vunpack.c.l.b16 %v38
  %v120 = vunpack.c.h.b16 %v38
  %v121 = vunpack.c.l.b16 %v39
  %v122 = vunpack.c.h.b16 %v39
  %v123 = vunpack.c.l.b16 %v40
  %v124 = vunpack.c.h.b16 %v40
  %v125 = vunpack.c.l.b16 %v41
  %v126 = vunpack.c.h.b16 %v41
  %v127 = vunpack.c.l.b16 %v42
  %v128 = vunpack.c.h.b16 %v42
  %v129 = vunpack.c.l.b16 %v43
  %v130 = vunpack.c.h.b16 %v43
  %v131 = vunpack.c.l.b16 %v44
  %v132 = vunpack.c.h.b16 %v44
  %v133 = vunpack.c.l.b16 %v45
  %v134 = vunpack.c.h.b16 %v45
  %v135 = vunpack.c.l.b16 %v46
  %v136 = vunpack.c.h.b16 %v46
  %v137 = vunpack.c.l.b16 %v47
  %v138 = vunpack.c.h.b16 %v47
  %v139 = vunpack.c.l.b16 %v48
  %v140 = vunpack.c.h.b16 %v48
  %v141 = vunpack.c.l.b16 %v49
  %v142 = vunpack.c.h.b16 %v49
  %v143 = vunpack.c.l.b16 %v50
  %v144 = vunpack.c.h.b16 %v50
  %v145 = vunpack.c.l.b16 %v51
  %v146 = vunpack.c.h.b16 %v51
  %v147 = vunpack.c.l.b16 %v52
  %v148 = vunpack.c.h.b16 %v52
  %v149 = vunpack.c.l.b16 %v53
  %v150 = vunpack.c.h.b16 %v53
  %v151 = vunpack.c.l.b16 %v54
  %v152 = vunpack.c.h.b16 %v54
  %v153 = vunpack.c.l.b16 %v55
  %v154 = vunpack.c.h.b16 %v55
  %v155 = vunpack.c.l.b16 %v56
  %v156 = vunpack.c.h.b16 %v56
  %v157 = vunpack.c.l.b16 %v57
  %v158 = vunpack.c.h.b16 %v57
  %v159 = vunpack.c.l.b16 %v58
  %v160 = vunpack.c.h.b16 %v58
  %v161 = vunpack.c.l.b16 %v59
  %v162 = vunpack.c.h.b16 %v59
  %v163 = vpack.c.b16 %v103, %v99
  %v164 = vpack.c.b16 %v104, %v100
  %v165 = vpack.c.b16 %v105, %v101
  %v166 = vpack.c.b16 %v106, %v102
  %v167 = vpack.c.b16 %v111, %v107
  %v168 = vpack.c.b16 %v112, %v108
  %v169 = vpack.c.b16 %v113, %v109
  %v170 = vpack.c.b16 %v114, %v110
  %v171 = vpack.c.b16 %v119, %v115
  %v172 = vpack.c.b16 %v120, %v116
  %v173 = vpack.c.b16 %v121, %v117
  %v174 = vpack.c.b16 %v122, %v118
  %v175 = vpack.c.b16 %v127, %v123
  %v176 = vpack.c.b16 %v128, %v124
  %v177 = vpack.c.b16 %v129, %v125
  %v178 = vpack.c.b16 %v130, %v126
  %v179 = vpack.c.b16 %v135, %v131
  %v180 = vpack.c.b16 %v136, %v132
  %v181 = vpack.c.b16 %v137, %v133
  %v182 = vpack.c.b16 %v138, %v134
  %v183 = vpack.c.b16 %v143, %v139
  %v184 = vpack.c.b16 %v144, %v140
  %v185 = vpack.c.b16 %v145, %v141
  %v186 = vpack.c.b16 %v146, %v142
  %v187 = vpack.c.b16 %v151, %v147
  %v188 = vpack.c.b16 %v152, %v148
  %v189 = vpack.c.b16 %v153, %v149
  %v190 = vpack.c.b16 %v154, %v150
  %v191 = vpack.c.b16 %v159, %v155
  %v192 = vpack.c.b16 %v160, %v156
  %v193 = vpack.c.b16 %v161, %v157
  %v194 = vpack.c.b16 %v162, %v158
  %227 = vmatprep.subr.bf16.mxu0 %v164
  %228 = vmatpush1.bf16.msra.mxu0 %v163
  %229 = vmatprep.subr.bf16.mxu0 %v168
  %230 = vmatpush1.bf16.msra.mxu0 %v167
  %231 = vmatprep.subr.bf16.mxu0 %v172
  %232 = vmatpush1.bf16.msra.mxu0 %v171
  %233 = vmatprep.subr.bf16.mxu0 %v176
  %234 = vmatpush1.bf16.msra.mxu0 %v175
  %235 = vmatprep.subr.bf16.mxu0 %v180
  %236 = vmatpush1.bf16.msra.mxu0 %v179
  %237 = vmatprep.subr.bf16.mxu0 %v184
  %238 = vmatpush1.bf16.msra.mxu0 %v183
  %239 = vmatprep.subr.bf16.mxu0 %v188
  %240 = vmatpush1.bf16.msra.mxu0 %v187
  %241 = vmatprep.subr.bf16.mxu0 %v192
  %242 = vmatpush1.bf16.msra.mxu0 %v191
  %243 = vmatprep.subr.bf16.mxu0 0
  %244 = vmatpush1.bf16.msra.mxu0 0
  %245 = vmatprep.subr.bf16.mxu0 0
  %246 = vmatpush1.bf16.msra.mxu0 0
  %247 = vmatprep.subr.bf16.mxu0 0
  %248 = vmatpush1.bf16.msra.mxu0 0
  %249 = vmatprep.subr.bf16.mxu0 0
  %250 = vmatpush1.bf16.msra.mxu0 0
  %251 = vmatprep.subr.bf16.mxu0 0
  %252 = vmatpush1.bf16.msra.mxu0 0
  %253 = vmatprep.subr.bf16.mxu0 0
  %254 = vmatpush1.bf16.msra.mxu0 0
  %255 = vmatprep.subr.bf16.mxu0 0
  %256 = vmatpush1.bf16.msra.mxu0 0
  %257 = vmatprep.subr.bf16.mxu0 0
  %258 = vmatpush1.bf16.msra.mxu0 0
  %259 = vmatprep.mubr.bf16.mxu0 0
  %260 = vmatmul.mubr.bf16.gmra.mrb[0].mxu0 %v66
  %v261 = vpop.f32.mrb[0].mxu0
  %v262 = vadd.f32 0.0, %v261
  %v263 = vpop.f32.mrb[0].mxu0
  %v264 = vadd.f32 0.0, %v263
  %v265 = vpop.f32.mrb[0].mxu0
  %v266 = vpop.f32.mrb[0].mxu0
  %267 = vdwg.mxu0
  %268 = vmatprep.subr.bf16.mxu0 %v166
  %269 = vmatpush1.bf16.msra.mxu0 %v165
  %270 = vmatprep.subr.bf16.mxu0 %v170
  %271 = vmatpush1.bf16.msra.mxu0 %v169
  %272 = vmatprep.subr.bf16.mxu0 %v174
  %273 = vmatpush1.bf16.msra.mxu0 %v173
  %274 = vmatprep.subr.bf16.mxu0 %v178
  %275 = vmatpush1.bf16.msra.mxu0 %v177
  %276 = vmatprep.subr.bf16.mxu0 %v182
  %277 = vmatpush1.bf16.msra.mxu0 %v181
  %278 = vmatprep.subr.bf16.mxu0 %v186
  %279 = vmatpush1.bf16.msra.mxu0 %v185
  %280 = vmatprep.subr.bf16.mxu0 %v190
  %281 = vmatpush1.bf16.msra.mxu0 %v189
  %282 = vmatprep.subr.bf16.mxu0 %v194
  %283 = vmatpush1.bf16.msra.mxu0 %v193
  %284 = vmatprep.subr.bf16.mxu0 0
  %285 = vmatpush1.bf16.msra.mxu0 0
  %286 = vmatprep.subr.bf16.mxu0 0
  %287 = vmatpush1.bf16.msra.mxu0 0
  %288 = vmatprep.subr.bf16.mxu0 0
  %289 = vmatpush1.bf16.msra.mxu0 0
  %290 = vmatprep.subr.bf16.mxu0 0
  %291 = vmatpush1.bf16.msra.mxu0 0
  %292 = vmatprep.subr.bf16.mxu0 0
  %293 = vmatpush1.bf16.msra.mxu0 0
  %294 = vmatprep.subr.bf16.mxu0 0
  %295 = vmatpush1.bf16.msra.mxu0 0
  %296 = vmatprep.subr.bf16.mxu0 0
  %297 = vmatpush1.bf16.msra.mxu0 0
  %298 = vmatprep.subr.bf16.mxu0 0
  %299 = vmatpush1.bf16.msra.mxu0 0
  %300 = vmatprep.mubr.bf16.mxu0 0
  %301 = vmatmul.mubr.bf16.gmra.mrb[0].mxu0 %v66
  %v302 = vpop.f32.mrb[0].mxu0
  %v303 = vadd.f32 0.0, %v302
  %v304 = vpop.f32.mrb[0].mxu0
  %v305 = vadd.f32 0.0, %v304
  %v306 = vpop.f32.mrb[0].mxu0
  %v307 = vpop.f32.mrb[0].mxu0
  %308 = vdwg.mxu0
  %v309 = vadd.f32 %v62, %v262
  %v310 = vadd.f32 %v63, %v264
  %v311 = vadd.f32 %v64, %v303
  %v312 = vadd.f32 %v65, %v305
  %v313 = vxor.u32 %v309, 2147483648
  %v314 = vxor.u32 %v310, 2147483648
  %v315 = vxor.u32 %v311, 2147483648
  %v316 = vmul.f32 %v313, 1.442695
  %v317 = vpow.pop %v316
  %v318 = vmul.f32 %v314, 1.442695
  %v319 = vpow.pop %v318
  %v320 = vmul.f32 %v315, 1.442695
  %v321 = vpow.pop %v320
  %v322 = vadd.f32 %v317, 1.0
  %v323 = vadd.f32 %v319, 1.0
  %v324 = vadd.f32 %v321, 1.0
  %v325 = vrcp.pop %v322
  %v326 = vmul.f32 1.0, %v325
  %v327 = vrcp.pop %v323
  %v328 = vmul.f32 1.0, %v327
  %v329 = vrcp.pop %v324
  %v330 = vmul.f32 1.0, %v329
  %v331 = vtanh.pop %v312
  %v332 = vmul.f32 %v328, %v61
  %v333 = vmul.f32 %v326, %v331
  %v334 = vadd.f32 %v332, %v333
  %v335 = vtanh.pop %v334
  %v336 = vmul.f32 %v330, %v335
  %337 = vst [vmem:[%s4] sm:$0xff] %v336
  %s338 = scalar_lea.vmem %s0, 32
  %v339 = vld [vmem:[%s338] sm:$0xff]
  %v340 = vld [vmem:[%s338 + $0x8] sm:$0xff]
  %v341 = vld [vmem:[%s338 + $0x10] sm:$0xff]
  %v342 = vld [vmem:[%s338 + $0x18] sm:$0xff]
  %v343 = vpack.c.bf16 %v336, %v336
  %344 = vmatprep.subr.bf16.mxu0 %v164
  %345 = vmatpush1.bf16.msra.mxu0 %v163
  %346 = vmatprep.subr.bf16.mxu0 %v168
  %347 = vmatpush1.bf16.msra.mxu0 %v167
  %348 = vmatprep.subr.bf16.mxu0 %v172
  %349 = vmatpush1.bf16.msra.mxu0 %v171
  %350 = vmatprep.subr.bf16.mxu0 %v176
  %351 = vmatpush1.bf16.msra.mxu0 %v175
  %352 = vmatprep.subr.bf16.mxu0 %v180
  %353 = vmatpush1.bf16.msra.mxu0 %v179
  %354 = vmatprep.subr.bf16.mxu0 %v184
  %355 = vmatpush1.bf16.msra.mxu0 %v183
  %356 = vmatprep.subr.bf16.mxu0 %v188
  %357 = vmatpush1.bf16.msra.mxu0 %v187
  %358 = vmatprep.subr.bf16.mxu0 %v192
  %359 = vmatpush1.bf16.msra.mxu0 %v191
  %360 = vmatprep.subr.bf16.mxu0 0
  %361 = vmatpush1.bf16.msra.mxu0 0
  %362 = vmatprep.subr.bf16.mxu0 0
  %363 = vmatpush1.bf16.msra.mxu0 0
  %364 = vmatprep.subr.bf16.mxu0 0
  %365 = vmatpush1.bf16.msra.mxu0 0
  %366 = vmatprep.subr.bf16.mxu0 0
  %367 = vmatpush1.bf16.msra.mxu0 0
  %368 = vmatprep.subr.bf16.mxu0 0
  %369 = vmatpush1.bf16.msra.mxu0 0
  %370 = vmatprep.subr.bf16.mxu0 0
  %371 = vmatpush1.bf16.msra.mxu0 0
  %372 = vmatprep.subr.bf16.mxu0 0
  %373 = vmatpush1.bf16.msra.mxu0 0
  %374 = vmatprep.subr.bf16.mxu0 0
  %375 = vmatpush1.bf16.msra.mxu0 0
  %376 = vmatprep.mubr.bf16.mxu0 0
  %377 = vmatmul.mubr.bf16.gmra.mrb[0].mxu0 %v343
  %v378 = vpop.f32.mrb[0].mxu0
  %v379 = vadd.f32 0.0, %v378
  %v380 = vpop.f32.mrb[0].mxu0
  %v381 = vadd.f32 0.0, %v380
  %v382 = vpop.f32.mrb[0].mxu0
  %v383 = vpop.f32.mrb[0].mxu0
  %384 = vdwg.mxu0
  %385 = vmatprep.subr.bf16.mxu0 %v166
  %386 = vmatpush1.bf16.msra.mxu0 %v165
  %387 = vmatprep.subr.bf16.mxu0 %v170
  %388 = vmatpush1.bf16.msra.mxu0 %v169
  %389 = vmatprep.subr.bf16.mxu0 %v174
  %390 = vmatpush1.bf16.msra.mxu0 %v173
  %391 = vmatprep.subr.bf16.mxu0 %v178
  %392 = vmatpush1.bf16.msra.mxu0 %v177
  %393 = vmatprep.subr.bf16.mxu0 %v182
  %394 = vmatpush1.bf16.msra.mxu0 %v181
  %395 = vmatprep.subr.bf16.mxu0 %v186
  %396 = vmatpush1.bf16.msra.mxu0 %v185
  %397 = vmatprep.subr.bf16.mxu0 %v190
  %398 = vmatpush1.bf16.msra.mxu0 %v189
  %399 = vmatprep.subr.bf16.mxu0 %v194
  %400 = vmatpush1.bf16.msra.mxu0 %v193
  %401 = vmatprep.subr.bf16.mxu0 0
  %402 = vmatpush1.bf16.msra.mxu0 0
  %403 = vmatprep.subr.bf16.mxu0 0
  %404 = vmatpush1.bf16.msra.mxu0 0
  %405 = vmatprep.subr.bf16.mxu0 0
  %406 = vmatpush1.bf16.msra.mxu0 0
  %407 = vmatprep.subr.bf16.mxu0 0
  %408 = vmatpush1.bf16.msra.mxu0 0
  %409 = vmatprep.subr.bf16.mxu0 0
  %410 = vmatpush1.bf16.msra.mxu0 0
  %411 = vmatprep.subr.bf16.mxu0 0
  %412 = vmatpush1.bf16.msra.mxu0 0
  %413 = vmatprep.subr.bf16.mxu0 0
  %414 = vmatpush1.bf16.msra.mxu0 0
  %415 = vmatprep.subr.bf16.mxu0 0
  %416 = vmatpush1.bf16.msra.mxu0 0
  %417 = vmatprep.mubr.bf16.mxu0 0
  %418 = vmatmul.mubr.bf16.gmra.mrb[0].mxu0 %v343
  %v419 = vpop.f32.mrb[0].mxu0
  %v420 = vadd.f32 0.0, %v419
  %v421 = vpop.f32.mrb[0].mxu0
  %v422 = vadd.f32 0.0, %v421
  %v423 = vpop.f32.mrb[0].mxu0
  %v424 = vpop.f32.mrb[0].mxu0
  %425 = vdwg.mxu0
  %v426 = vadd.f32 %v339, %v379
  %v427 = vadd.f32 %v340, %v381
  %v428 = vadd.f32 %v341, %v420
  %v429 = vadd.f32 %v342, %v422
  %v430 = vxor.u32 %v426, 2147483648
  %v431 = vxor.u32 %v427, 2147483648
  %v432 = vxor.u32 %v428, 2147483648
  %v433 = vmul.f32 %v430, 1.442695
  %v434 = vpow.pop %v433
  %v435 = vmul.f32 %v431, 1.442695
  %v436 = vpow.pop %v435
  %v437 = vmul.f32 %v432, 1.442695
  %v438 = vpow.pop %v437
  %v439 = vadd.f32 %v434, 1.0
  %v440 = vadd.f32 %v436, 1.0
  %v441 = vadd.f32 %v438, 1.0
  %v442 = vrcp.pop %v439
  %v443 = vmul.f32 1.0, %v442
  %v444 = vrcp.pop %v440
  %v445 = vmul.f32 1.0, %v444
  %v446 = vrcp.pop %v441
  %v447 = vmul.f32 1.0, %v446
  %v448 = vtanh.pop %v429
  %v449 = vmul.f32 %v445, %v334
  %v450 = vmul.f32 %v443, %v448
  %v451 = vadd.f32 %v449, %v450
  %v452 = vtanh.pop %v451
  %v453 = vmul.f32 %v447, %v452
  %s454 = scalar_lea.vmem %s4, 8
  %455 = vst [vmem:[%s454] sm:$0xff] %v453
  %s456 = scalar_lea.vmem %s0, 64
  %v457 = vld [vmem:[%s456] sm:$0xff]
  %v458 = vld [vmem:[%s456 + $0x8] sm:$0xff]
  %v459 = vld [vmem:[%s456 + $0x10] sm:$0xff]
  %v460 = vld [vmem:[%s456 + $0x18] sm:$0xff]
  %v461 = vpack.c.bf16 %v453, %v453
  %462 = vmatprep.subr.bf16.mxu0 %v164
  %463 = vmatpush1.bf16.msra.mxu0 %v163
  %464 = vmatprep.subr.bf16.mxu0 %v168
  %465 = vmatpush1.bf16.msra.mxu0 %v167
  %466 = vmatprep.subr.bf16.mxu0 %v172
  %467 = vmatpush1.bf16.msra.mxu0 %v171
  %468 = vmatprep.subr.bf16.mxu0 %v176
  %469 = vmatpush1.bf16.msra.mxu0 %v175
  %470 = vmatprep.subr.bf16.mxu0 %v180
  %471 = vmatpush1.bf16.msra.mxu0 %v179
  %472 = vmatprep.subr.bf16.mxu0 %v184
  %473 = vmatpush1.bf16.msra.mxu0 %v183
  %474 = vmatprep.subr.bf16.mxu0 %v188
  %475 = vmatpush1.bf16.msra.mxu0 %v187
  %476 = vmatprep.subr.bf16.mxu0 %v192
  %477 = vmatpush1.bf16.msra.mxu0 %v191
  %478 = vmatprep.subr.bf16.mxu0 0
  %479 = vmatpush1.bf16.msra.mxu0 0
  %480 = vmatprep.subr.bf16.mxu0 0
  %481 = vmatpush1.bf16.msra.mxu0 0
  %482 = vmatprep.subr.bf16.mxu0 0
  %483 = vmatpush1.bf16.msra.mxu0 0
  %484 = vmatprep.subr.bf16.mxu0 0
  %485 = vmatpush1.bf16.msra.mxu0 0
  %486 = vmatprep.subr.bf16.mxu0 0
  %487 = vmatpush1.bf16.msra.mxu0 0
  %488 = vmatprep.subr.bf16.mxu0 0
  %489 = vmatpush1.bf16.msra.mxu0 0
  %490 = vmatprep.subr.bf16.mxu0 0
  %491 = vmatpush1.bf16.msra.mxu0 0
  %492 = vmatprep.subr.bf16.mxu0 0
  %493 = vmatpush1.bf16.msra.mxu0 0
  %494 = vmatprep.mubr.bf16.mxu0 0
  %495 = vmatmul.mubr.bf16.gmra.mrb[0].mxu0 %v461
  %v496 = vpop.f32.mrb[0].mxu0
  %v497 = vadd.f32 0.0, %v496
  %v498 = vpop.f32.mrb[0].mxu0
  %v499 = vadd.f32 0.0, %v498
  %v500 = vpop.f32.mrb[0].mxu0
  %v501 = vpop.f32.mrb[0].mxu0
  %502 = vdwg.mxu0
  %503 = vmatprep.subr.bf16.mxu0 %v166
  %504 = vmatpush1.bf16.msra.mxu0 %v165
  %505 = vmatprep.subr.bf16.mxu0 %v170
  %506 = vmatpush1.bf16.msra.mxu0 %v169
  %507 = vmatprep.subr.bf16.mxu0 %v174
  %508 = vmatpush1.bf16.msra.mxu0 %v173
  %509 = vmatprep.subr.bf16.mxu0 %v178
  %510 = vmatpush1.bf16.msra.mxu0 %v177
  %511 = vmatprep.subr.bf16.mxu0 %v182
  %512 = vmatpush1.bf16.msra.mxu0 %v181
  %513 = vmatprep.subr.bf16.mxu0 %v186
  %514 = vmatpush1.bf16.msra.mxu0 %v185
  %515 = vmatprep.subr.bf16.mxu0 %v190
  %516 = vmatpush1.bf16.msra.mxu0 %v189
  %517 = vmatprep.subr.bf16.mxu0 %v194
  %518 = vmatpush1.bf16.msra.mxu0 %v193
  %519 = vmatprep.subr.bf16.mxu0 0
  %520 = vmatpush1.bf16.msra.mxu0 0
  %521 = vmatprep.subr.bf16.mxu0 0
  %522 = vmatpush1.bf16.msra.mxu0 0
  %523 = vmatprep.subr.bf16.mxu0 0
  %524 = vmatpush1.bf16.msra.mxu0 0
  %525 = vmatprep.subr.bf16.mxu0 0
  %526 = vmatpush1.bf16.msra.mxu0 0
  %527 = vmatprep.subr.bf16.mxu0 0
  %528 = vmatpush1.bf16.msra.mxu0 0
  %529 = vmatprep.subr.bf16.mxu0 0
  %530 = vmatpush1.bf16.msra.mxu0 0
  %531 = vmatprep.subr.bf16.mxu0 0
  %532 = vmatpush1.bf16.msra.mxu0 0
  %533 = vmatprep.subr.bf16.mxu0 0
  %534 = vmatpush1.bf16.msra.mxu0 0
  %535 = vmatprep.mubr.bf16.mxu0 0
  %536 = vmatmul.mubr.bf16.gmra.mrb[0].mxu0 %v461
  %v537 = vpop.f32.mrb[0].mxu0
  %v538 = vadd.f32 0.0, %v537
  %v539 = vpop.f32.mrb[0].mxu0
  %v540 = vadd.f32 0.0, %v539
  %v541 = vpop.f32.mrb[0].mxu0
  %v542 = vpop.f32.mrb[0].mxu0
  %543 = vdwg.mxu0
  %v544 = vadd.f32 %v457, %v497
  %v545 = vadd.f32 %v458, %v499
  %v546 = vadd.f32 %v459, %v538
  %v547 = vadd.f32 %v460, %v540
  %v548 = vxor.u32 %v544, 2147483648
  %v549 = vxor.u32 %v545, 2147483648
  %v550 = vxor.u32 %v546, 2147483648
  %v551 = vmul.f32 %v548, 1.442695
  %v552 = vpow.pop %v551
  %v553 = vmul.f32 %v549, 1.442695
  %v554 = vpow.pop %v553
  %v555 = vmul.f32 %v550, 1.442695
  %v556 = vpow.pop %v555
  %v557 = vadd.f32 %v552, 1.0
  %v558 = vadd.f32 %v554, 1.0
  %v559 = vadd.f32 %v556, 1.0
  %v560 = vrcp.pop %v557
  %v561 = vmul.f32 1.0, %v560
  %v562 = vrcp.pop %v558
  %v563 = vmul.f32 1.0, %v562
  %v564 = vrcp.pop %v559
  %v565 = vmul.f32 1.0, %v564
  %v566 = vtanh.pop %v547
  %v567 = vmul.f32 %v563, %v451
  %v568 = vmul.f32 %v561, %v566
  %v569 = vadd.f32 %v567, %v568
  %v570 = vtanh.pop %v569
  %v571 = vmul.f32 %v565, %v570
  %s572 = scalar_lea.vmem %s4, 16
  %573 = vst [vmem:[%s572] sm:$0xff] %v571
  %s574 = scalar_lea.vmem %s0, 96
  %v575 = vld [vmem:[%s574] sm:$0xff]
  %v576 = vld [vmem:[%s574 + $0x8] sm:$0xff]
  %v577 = vld [vmem:[%s574 + $0x10] sm:$0xff]
  %v578 = vld [vmem:[%s574 + $0x18] sm:$0xff]
  %v579 = vpack.c.bf16 %v571, %v571
  %580 = vmatprep.subr.bf16.mxu0 %v164
  %581 = vmatpush1.bf16.msra.mxu0 %v163
  %582 = vmatprep.subr.bf16.mxu0 %v168
  %583 = vmatpush1.bf16.msra.mxu0 %v167
  %584 = vmatprep.subr.bf16.mxu0 %v172
  %585 = vmatpush1.bf16.msra.mxu0 %v171
  %586 = vmatprep.subr.bf16.mxu0 %v176
  %587 = vmatpush1.bf16.msra.mxu0 %v175
  %588 = vmatprep.subr.bf16.mxu0 %v180
  %589 = vmatpush1.bf16.msra.mxu0 %v179
  %590 = vmatprep.subr.bf16.mxu0 %v184
  %591 = vmatpush1.bf16.msra.mxu0 %v183
  %592 = vmatprep.subr.bf16.mxu0 %v188
  %593 = vmatpush1.bf16.msra.mxu0 %v187
  %594 = vmatprep.subr.bf16.mxu0 %v192
  %595 = vmatpush1.bf16.msra.mxu0 %v191
  %596 = vmatprep.subr.bf16.mxu0 0
  %597 = vmatpush1.bf16.msra.mxu0 0
  %598 = vmatprep.subr.bf16.mxu0 0
  %599 = vmatpush1.bf16.msra.mxu0 0
  %600 = vmatprep.subr.bf16.mxu0 0
  %601 = vmatpush1.bf16.msra.mxu0 0
  %602 = vmatprep.subr.bf16.mxu0 0
  %603 = vmatpush1.bf16.msra.mxu0 0
  %604 = vmatprep.subr.bf16.mxu0 0
  %605 = vmatpush1.bf16.msra.mxu0 0
  %606 = vmatprep.subr.bf16.mxu0 0
  %607 = vmatpush1.bf16.msra.mxu0 0
  %608 = vmatprep.subr.bf16.mxu0 0
  %609 = vmatpush1.bf16.msra.mxu0 0
  %610 = vmatprep.subr.bf16.mxu0 0
  %611 = vmatpush1.bf16.msra.mxu0 0
  %612 = vmatprep.mubr.bf16.mxu0 0
  %613 = vmatmul.mubr.bf16.gmra.mrb[0].mxu0 %v579
  %v614 = vpop.f32.mrb[0].mxu0
  %v615 = vadd.f32 0.0, %v614
  %v616 = vpop.f32.mrb[0].mxu0
  %v617 = vadd.f32 0.0, %v616
  %v618 = vpop.f32.mrb[0].mxu0
  %v619 = vpop.f32.mrb[0].mxu0
  %620 = vdwg.mxu0
  %621 = vmatprep.subr.bf16.mxu0 %v166
  %622 = vmatpush1.bf16.msra.mxu0 %v165
  %623 = vmatprep.subr.bf16.mxu0 %v170
  %624 = vmatpush1.bf16.msra.mxu0 %v169
  %625 = vmatprep.subr.bf16.mxu0 %v174
  %626 = vmatpush1.bf16.msra.mxu0 %v173
  %627 = vmatprep.subr.bf16.mxu0 %v178
  %628 = vmatpush1.bf16.msra.mxu0 %v177
  %629 = vmatprep.subr.bf16.mxu0 %v182
  %630 = vmatpush1.bf16.msra.mxu0 %v181
  %631 = vmatprep.subr.bf16.mxu0 %v186
  %632 = vmatpush1.bf16.msra.mxu0 %v185
  %633 = vmatprep.subr.bf16.mxu0 %v190
  %634 = vmatpush1.bf16.msra.mxu0 %v189
  %635 = vmatprep.subr.bf16.mxu0 %v194
  %636 = vmatpush1.bf16.msra.mxu0 %v193
  %637 = vmatprep.subr.bf16.mxu0 0
  %638 = vmatpush1.bf16.msra.mxu0 0
  %639 = vmatprep.subr.bf16.mxu0 0
  %640 = vmatpush1.bf16.msra.mxu0 0
  %641 = vmatprep.subr.bf16.mxu0 0
  %642 = vmatpush1.bf16.msra.mxu0 0
  %643 = vmatprep.subr.bf16.mxu0 0
  %644 = vmatpush1.bf16.msra.mxu0 0
  %645 = vmatprep.subr.bf16.mxu0 0
  %646 = vmatpush1.bf16.msra.mxu0 0
  %647 = vmatprep.subr.bf16.mxu0 0
  %648 = vmatpush1.bf16.msra.mxu0 0
  %649 = vmatprep.subr.bf16.mxu0 0
  %650 = vmatpush1.bf16.msra.mxu0 0
  %651 = vmatprep.subr.bf16.mxu0 0
  %652 = vmatpush1.bf16.msra.mxu0 0
  %653 = vmatprep.mubr.bf16.mxu0 0
  %654 = vmatmul.mubr.bf16.gmra.mrb[0].mxu0 %v579
  %v655 = vpop.f32.mrb[0].mxu0
  %v656 = vadd.f32 0.0, %v655
  %v657 = vpop.f32.mrb[0].mxu0
  %v658 = vadd.f32 0.0, %v657
  %v659 = vpop.f32.mrb[0].mxu0
  %v660 = vpop.f32.mrb[0].mxu0
  %661 = vdwg.mxu0
  %v662 = vadd.f32 %v575, %v615
  %v663 = vadd.f32 %v576, %v617
  %v664 = vadd.f32 %v577, %v656
  %v665 = vadd.f32 %v578, %v658
  %v666 = vxor.u32 %v662, 2147483648
  %v667 = vxor.u32 %v663, 2147483648
  %v668 = vxor.u32 %v664, 2147483648
  %v669 = vmul.f32 %v666, 1.442695
  %v670 = vpow.pop %v669
  %v671 = vmul.f32 %v667, 1.442695
  %v672 = vpow.pop %v671
  %v673 = vmul.f32 %v668, 1.442695
  %v674 = vpow.pop %v673
  %v675 = vadd.f32 %v670, 1.0
  %v676 = vadd.f32 %v672, 1.0
  %v677 = vadd.f32 %v674, 1.0
  %v678 = vrcp.pop %v675
  %v679 = vmul.f32 1.0, %v678
  %v680 = vrcp.pop %v676
  %v681 = vmul.f32 1.0, %v680
  %v682 = vrcp.pop %v677
  %v683 = vmul.f32 1.0, %v682
  %v684 = vtanh.pop %v665
  %v685 = vmul.f32 %v681, %v569
  %v686 = vmul.f32 %v679, %v684
  %v687 = vadd.f32 %v685, %v686
  %v688 = vtanh.pop %v687
  %v689 = vmul.f32 %v683, %v688
  %s690 = scalar_lea.vmem %s4, 24
  %691 = vst [vmem:[%s690] sm:$0xff] %v689
  %s692 = scalar_lea.vmem %s0, 128
  %v693 = vld [vmem:[%s692] sm:$0xff]
  %v694 = vld [vmem:[%s692 + $0x8] sm:$0xff]
  %v695 = vld [vmem:[%s692 + $0x10] sm:$0xff]
  %v696 = vld [vmem:[%s692 + $0x18] sm:$0xff]
  %v697 = vpack.c.bf16 %v689, %v689
  %698 = vmatprep.subr.bf16.mxu0 %v164
  %699 = vmatpush1.bf16.msra.mxu0 %v163
  %700 = vmatprep.subr.bf16.mxu0 %v168
  %701 = vmatpush1.bf16.msra.mxu0 %v167
  %702 = vmatprep.subr.bf16.mxu0 %v172
  %703 = vmatpush1.bf16.msra.mxu0 %v171
  %704 = vmatprep.subr.bf16.mxu0 %v176
  %705 = vmatpush1.bf16.msra.mxu0 %v175
  %706 = vmatprep.subr.bf16.mxu0 %v180
  %707 = vmatpush1.bf16.msra.mxu0 %v179
  %708 = vmatprep.subr.bf16.mxu0 %v184
  %709 = vmatpush1.bf16.msra.mxu0 %v183
  %710 = vmatprep.subr.bf16.mxu0 %v188
  %711 = vmatpush1.bf16.msra.mxu0 %v187
  %712 = vmatprep.subr.bf16.mxu0 %v192
  %713 = vmatpush1.bf16.msra.mxu0 %v191
  %714 = vmatprep.subr.bf16.mxu0 0
  %715 = vmatpush1.bf16.msra.mxu0 0
  %716 = vmatprep.subr.bf16.mxu0 0
  %717 = vmatpush1.bf16.msra.mxu0 0
  %718 = vmatprep.subr.bf16.mxu0 0
  %719 = vmatpush1.bf16.msra.mxu0 0
  %720 = vmatprep.subr.bf16.mxu0 0
  %721 = vmatpush1.bf16.msra.mxu0 0
  %722 = vmatprep.subr.bf16.mxu0 0
  %723 = vmatpush1.bf16.msra.mxu0 0
  %724 = vmatprep.subr.bf16.mxu0 0
  %725 = vmatpush1.bf16.msra.mxu0 0
  %726 = vmatprep.subr.bf16.mxu0 0
  %727 = vmatpush1.bf16.msra.mxu0 0
  %728 = vmatprep.subr.bf16.mxu0 0
  %729 = vmatpush1.bf16.msra.mxu0 0
  %730 = vmatprep.mubr.bf16.mxu0 0
  %731 = vmatmul.mubr.bf16.gmra.mrb[0].mxu0 %v697
  %v732 = vpop.f32.mrb[0].mxu0
  %v733 = vadd.f32 0.0, %v732
  %v734 = vpop.f32.mrb[0].mxu0
  %v735 = vadd.f32 0.0, %v734
  %v736 = vpop.f32.mrb[0].mxu0
  %v737 = vpop.f32.mrb[0].mxu0
  %738 = vdwg.mxu0
  %739 = vmatprep.subr.bf16.mxu0 %v166
  %740 = vmatpush1.bf16.msra.mxu0 %v165
  %741 = vmatprep.subr.bf16.mxu0 %v170
  %742 = vmatpush1.bf16.msra.mxu0 %v169
  %743 = vmatprep.subr.bf16.mxu0 %v174
  %744 = vmatpush1.bf16.msra.mxu0 %v173
  %745 = vmatprep.subr.bf16.mxu0 %v178
  %746 = vmatpush1.bf16.msra.mxu0 %v177
  %747 = vmatprep.subr.bf16.mxu0 %v182
  %748 = vmatpush1.bf16.msra.mxu0 %v181
  %749 = vmatprep.subr.bf16.mxu0 %v186
  %750 = vmatpush1.bf16.msra.mxu0 %v185
  %751 = vmatprep.subr.bf16.mxu0 %v190
  %752 = vmatpush1.bf16.msra.mxu0 %v189
  %753 = vmatprep.subr.bf16.mxu0 %v194
  %754 = vmatpush1.bf16.msra.mxu0 %v193
  %755 = vmatprep.subr.bf16.mxu0 0
  %756 = vmatpush1.bf16.msra.mxu0 0
  %757 = vmatprep.subr.bf16.mxu0 0
  %758 = vmatpush1.bf16.msra.mxu0 0
  %759 = vmatprep.subr.bf16.mxu0 0
  %760 = vmatpush1.bf16.msra.mxu0 0
  %761 = vmatprep.subr.bf16.mxu0 0
  %762 = vmatpush1.bf16.msra.mxu0 0
  %763 = vmatprep.subr.bf16.mxu0 0
  %764 = vmatpush1.bf16.msra.mxu0 0
  %765 = vmatprep.subr.bf16.mxu0 0
  %766 = vmatpush1.bf16.msra.mxu0 0
  %767 = vmatprep.subr.bf16.mxu0 0
  %768 = vmatpush1.bf16.msra.mxu0 0
  %769 = vmatprep.subr.bf16.mxu0 0
  %770 = vmatpush1.bf16.msra.mxu0 0
  %771 = vmatprep.mubr.bf16.mxu0 0
  %772 = vmatmul.mubr.bf16.gmra.mrb[0].mxu0 %v697
  %v773 = vpop.f32.mrb[0].mxu0
  %v774 = vadd.f32 0.0, %v773
  %v775 = vpop.f32.mrb[0].mxu0
  %v776 = vadd.f32 0.0, %v775
  %v777 = vpop.f32.mrb[0].mxu0
  %v778 = vpop.f32.mrb[0].mxu0
  %779 = vdwg.mxu0
  %v780 = vadd.f32 %v693, %v733
  %v781 = vadd.f32 %v694, %v735
  %v782 = vadd.f32 %v695, %v774
  %v783 = vadd.f32 %v696, %v776
  %v784 = vxor.u32 %v780, 2147483648
  %v785 = vxor.u32 %v781, 2147483648
  %v786 = vxor.u32 %v782, 2147483648
  %v787 = vmul.f32 %v784, 1.442695
  %v788 = vpow.pop %v787
  %v789 = vmul.f32 %v785, 1.442695
  %v790 = vpow.pop %v789
  %v791 = vmul.f32 %v786, 1.442695
  %v792 = vpow.pop %v791
  %v793 = vadd.f32 %v788, 1.0
  %v794 = vadd.f32 %v790, 1.0
  %v795 = vadd.f32 %v792, 1.0
  %v796 = vrcp.pop %v793
  %v797 = vmul.f32 1.0, %v796
  %v798 = vrcp.pop %v794
  %v799 = vmul.f32 1.0, %v798
  %v800 = vrcp.pop %v795
  %v801 = vmul.f32 1.0, %v800
  %v802 = vtanh.pop %v783
  %v803 = vmul.f32 %v799, %v687
  %v804 = vmul.f32 %v797, %v802
  %v805 = vadd.f32 %v803, %v804
  %v806 = vtanh.pop %v805
  %v807 = vmul.f32 %v801, %v806
  %s808 = scalar_lea.vmem %s4, 32
  %809 = vst [vmem:[%s808] sm:$0xff] %v807
  %s810 = scalar_lea.vmem %s0, 160
  %v811 = vld [vmem:[%s810] sm:$0xff]
  %v812 = vld [vmem:[%s810 + $0x8] sm:$0xff]
  %v813 = vld [vmem:[%s810 + $0x10] sm:$0xff]
  %v814 = vld [vmem:[%s810 + $0x18] sm:$0xff]
  %v815 = vpack.c.bf16 %v807, %v807
  %816 = vmatprep.subr.bf16.mxu0 %v164
  %817 = vmatpush1.bf16.msra.mxu0 %v163
  %818 = vmatprep.subr.bf16.mxu0 %v168
  %819 = vmatpush1.bf16.msra.mxu0 %v167
  %820 = vmatprep.subr.bf16.mxu0 %v172
  %821 = vmatpush1.bf16.msra.mxu0 %v171
  %822 = vmatprep.subr.bf16.mxu0 %v176
  %823 = vmatpush1.bf16.msra.mxu0 %v175
  %824 = vmatprep.subr.bf16.mxu0 %v180
  %825 = vmatpush1.bf16.msra.mxu0 %v179
  %826 = vmatprep.subr.bf16.mxu0 %v184
  %827 = vmatpush1.bf16.msra.mxu0 %v183
  %828 = vmatprep.subr.bf16.mxu0 %v188
  %829 = vmatpush1.bf16.msra.mxu0 %v187
  %830 = vmatprep.subr.bf16.mxu0 %v192
  %831 = vmatpush1.bf16.msra.mxu0 %v191
  %832 = vmatprep.subr.bf16.mxu0 0
  %833 = vmatpush1.bf16.msra.mxu0 0
  %834 = vmatprep.subr.bf16.mxu0 0
  %835 = vmatpush1.bf16.msra.mxu0 0
  %836 = vmatprep.subr.bf16.mxu0 0
  %837 = vmatpush1.bf16.msra.mxu0 0
  %838 = vmatprep.subr.bf16.mxu0 0
  %839 = vmatpush1.bf16.msra.mxu0 0
  %840 = vmatprep.subr.bf16.mxu0 0
  %841 = vmatpush1.bf16.msra.mxu0 0
  %842 = vmatprep.subr.bf16.mxu0 0
  %843 = vmatpush1.bf16.msra.mxu0 0
  %844 = vmatprep.subr.bf16.mxu0 0
  %845 = vmatpush1.bf16.msra.mxu0 0
  %846 = vmatprep.subr.bf16.mxu0 0
  %847 = vmatpush1.bf16.msra.mxu0 0
  %848 = vmatprep.mubr.bf16.mxu0 0
  %849 = vmatmul.mubr.bf16.gmra.mrb[0].mxu0 %v815
  %v850 = vpop.f32.mrb[0].mxu0
  %v851 = vadd.f32 0.0, %v850
  %v852 = vpop.f32.mrb[0].mxu0
  %v853 = vadd.f32 0.0, %v852
  %v854 = vpop.f32.mrb[0].mxu0
  %v855 = vpop.f32.mrb[0].mxu0
  %856 = vdwg.mxu0
  %857 = vmatprep.subr.bf16.mxu0 %v166
  %858 = vmatpush1.bf16.msra.mxu0 %v165
  %859 = vmatprep.subr.bf16.mxu0 %v170
  %860 = vmatpush1.bf16.msra.mxu0 %v169
  %861 = vmatprep.subr.bf16.mxu0 %v174
  %862 = vmatpush1.bf16.msra.mxu0 %v173
  %863 = vmatprep.subr.bf16.mxu0 %v178
  %864 = vmatpush1.bf16.msra.mxu0 %v177
  %865 = vmatprep.subr.bf16.mxu0 %v182
  %866 = vmatpush1.bf16.msra.mxu0 %v181
  %867 = vmatprep.subr.bf16.mxu0 %v186
  %868 = vmatpush1.bf16.msra.mxu0 %v185
  %869 = vmatprep.subr.bf16.mxu0 %v190
  %870 = vmatpush1.bf16.msra.mxu0 %v189
  %871 = vmatprep.subr.bf16.mxu0 %v194
  %872 = vmatpush1.bf16.msra.mxu0 %v193
  %873 = vmatprep.subr.bf16.mxu0 0
  %874 = vmatpush1.bf16.msra.mxu0 0
  %875 = vmatprep.subr.bf16.mxu0 0
  %876 = vmatpush1.bf16.msra.mxu0 0
  %877 = vmatprep.subr.bf16.mxu0 0
  %878 = vmatpush1.bf16.msra.mxu0 0
  %879 = vmatprep.subr.bf16.mxu0 0
  %880 = vmatpush1.bf16.msra.mxu0 0
  %881 = vmatprep.subr.bf16.mxu0 0
  %882 = vmatpush1.bf16.msra.mxu0 0
  %883 = vmatprep.subr.bf16.mxu0 0
  %884 = vmatpush1.bf16.msra.mxu0 0
  %885 = vmatprep.subr.bf16.mxu0 0
  %886 = vmatpush1.bf16.msra.mxu0 0
  %887 = vmatprep.subr.bf16.mxu0 0
  %888 = vmatpush1.bf16.msra.mxu0 0
  %889 = vmatprep.mubr.bf16.mxu0 0
  %890 = vmatmul.mubr.bf16.gmra.mrb[0].mxu0 %v815
  %v891 = vpop.f32.mrb[0].mxu0
  %v892 = vadd.f32 0.0, %v891
  %v893 = vpop.f32.mrb[0].mxu0
  %v894 = vadd.f32 0.0, %v893
  %v895 = vpop.f32.mrb[0].mxu0
  %v896 = vpop.f32.mrb[0].mxu0
  %897 = vdwg.mxu0
  %v898 = vadd.f32 %v811, %v851
  %v899 = vadd.f32 %v812, %v853
  %v900 = vadd.f32 %v813, %v892
  %v901 = vadd.f32 %v814, %v894
  %v902 = vxor.u32 %v898, 2147483648
  %v903 = vxor.u32 %v899, 2147483648
  %v904 = vxor.u32 %v900, 2147483648
  %v905 = vmul.f32 %v902, 1.442695
  %v906 = vpow.pop %v905
  %v907 = vmul.f32 %v903, 1.442695
  %v908 = vpow.pop %v907
  %v909 = vmul.f32 %v904, 1.442695
  %v910 = vpow.pop %v909
  %v911 = vadd.f32 %v906, 1.0
  %v912 = vadd.f32 %v908, 1.0
  %v913 = vadd.f32 %v910, 1.0
  %v914 = vrcp.pop %v911
  %v915 = vmul.f32 1.0, %v914
  %v916 = vrcp.pop %v912
  %v917 = vmul.f32 1.0, %v916
  %v918 = vrcp.pop %v913
  %v919 = vmul.f32 1.0, %v918
  %v920 = vtanh.pop %v901
  %v921 = vmul.f32 %v917, %v805
  %v922 = vmul.f32 %v915, %v920
  %v923 = vadd.f32 %v921, %v922
  %v924 = vtanh.pop %v923
  %v925 = vmul.f32 %v919, %v924
  %s926 = scalar_lea.vmem %s4, 40
  %927 = vst [vmem:[%s926] sm:$0xff] %v925
  %s928 = scalar_lea.vmem %s0, 192
  %v929 = vld [vmem:[%s928] sm:$0xff]
  %v930 = vld [vmem:[%s928 + $0x8] sm:$0xff]
  %v931 = vld [vmem:[%s928 + $0x10] sm:$0xff]
  %v932 = vld [vmem:[%s928 + $0x18] sm:$0xff]
  %v933 = vpack.c.bf16 %v925, %v925
  %934 = vmatprep.subr.bf16.mxu0 %v164
  %935 = vmatpush1.bf16.msra.mxu0 %v163
  %936 = vmatprep.subr.bf16.mxu0 %v168
  %937 = vmatpush1.bf16.msra.mxu0 %v167
  %938 = vmatprep.subr.bf16.mxu0 %v172
  %939 = vmatpush1.bf16.msra.mxu0 %v171
  %940 = vmatprep.subr.bf16.mxu0 %v176
  %941 = vmatpush1.bf16.msra.mxu0 %v175
  %942 = vmatprep.subr.bf16.mxu0 %v180
  %943 = vmatpush1.bf16.msra.mxu0 %v179
  %944 = vmatprep.subr.bf16.mxu0 %v184
  %945 = vmatpush1.bf16.msra.mxu0 %v183
  %946 = vmatprep.subr.bf16.mxu0 %v188
  %947 = vmatpush1.bf16.msra.mxu0 %v187
  %948 = vmatprep.subr.bf16.mxu0 %v192
  %949 = vmatpush1.bf16.msra.mxu0 %v191
  %950 = vmatprep.subr.bf16.mxu0 0
  %951 = vmatpush1.bf16.msra.mxu0 0
  %952 = vmatprep.subr.bf16.mxu0 0
  %953 = vmatpush1.bf16.msra.mxu0 0
  %954 = vmatprep.subr.bf16.mxu0 0
  %955 = vmatpush1.bf16.msra.mxu0 0
  %956 = vmatprep.subr.bf16.mxu0 0
  %957 = vmatpush1.bf16.msra.mxu0 0
  %958 = vmatprep.subr.bf16.mxu0 0
  %959 = vmatpush1.bf16.msra.mxu0 0
  %960 = vmatprep.subr.bf16.mxu0 0
  %961 = vmatpush1.bf16.msra.mxu0 0
  %962 = vmatprep.subr.bf16.mxu0 0
  %963 = vmatpush1.bf16.msra.mxu0 0
  %964 = vmatprep.subr.bf16.mxu0 0
  %965 = vmatpush1.bf16.msra.mxu0 0
  %966 = vmatprep.mubr.bf16.mxu0 0
  %967 = vmatmul.mubr.bf16.gmra.mrb[0].mxu0 %v933
  %v968 = vpop.f32.mrb[0].mxu0
  %v969 = vadd.f32 0.0, %v968
  %v970 = vpop.f32.mrb[0].mxu0
  %v971 = vadd.f32 0.0, %v970
  %v972 = vpop.f32.mrb[0].mxu0
  %v973 = vpop.f32.mrb[0].mxu0
  %974 = vdwg.mxu0
  %975 = vmatprep.subr.bf16.mxu0 %v166
  %976 = vmatpush1.bf16.msra.mxu0 %v165
  %977 = vmatprep.subr.bf16.mxu0 %v170
  %978 = vmatpush1.bf16.msra.mxu0 %v169
  %979 = vmatprep.subr.bf16.mxu0 %v174
  %980 = vmatpush1.bf16.msra.mxu0 %v173
  %981 = vmatprep.subr.bf16.mxu0 %v178
  %982 = vmatpush1.bf16.msra.mxu0 %v177
  %983 = vmatprep.subr.bf16.mxu0 %v182
  %984 = vmatpush1.bf16.msra.mxu0 %v181
  %985 = vmatprep.subr.bf16.mxu0 %v186
  %986 = vmatpush1.bf16.msra.mxu0 %v185
  %987 = vmatprep.subr.bf16.mxu0 %v190
  %988 = vmatpush1.bf16.msra.mxu0 %v189
  %989 = vmatprep.subr.bf16.mxu0 %v194
  %990 = vmatpush1.bf16.msra.mxu0 %v193
  %991 = vmatprep.subr.bf16.mxu0 0
  %992 = vmatpush1.bf16.msra.mxu0 0
  %993 = vmatprep.subr.bf16.mxu0 0
  %994 = vmatpush1.bf16.msra.mxu0 0
  %995 = vmatprep.subr.bf16.mxu0 0
  %996 = vmatpush1.bf16.msra.mxu0 0
  %997 = vmatprep.subr.bf16.mxu0 0
  %998 = vmatpush1.bf16.msra.mxu0 0
  %999 = vmatprep.subr.bf16.mxu0 0
  %1000 = vmatpush1.bf16.msra.mxu0 0
  %1001 = vmatprep.subr.bf16.mxu0 0
  %1002 = vmatpush1.bf16.msra.mxu0 0
  %1003 = vmatprep.subr.bf16.mxu0 0
  %1004 = vmatpush1.bf16.msra.mxu0 0
  %1005 = vmatprep.subr.bf16.mxu0 0
  %1006 = vmatpush1.bf16.msra.mxu0 0
  %1007 = vmatprep.mubr.bf16.mxu0 0
  %1008 = vmatmul.mubr.bf16.gmra.mrb[0].mxu0 %v933
  %v1009 = vpop.f32.mrb[0].mxu0
  %v1010 = vadd.f32 0.0, %v1009
  %v1011 = vpop.f32.mrb[0].mxu0
  %v1012 = vadd.f32 0.0, %v1011
  %v1013 = vpop.f32.mrb[0].mxu0
  %v1014 = vpop.f32.mrb[0].mxu0
  %1015 = vdwg.mxu0
  %v1016 = vadd.f32 %v929, %v969
  %v1017 = vadd.f32 %v930, %v971
  %v1018 = vadd.f32 %v931, %v1010
  %v1019 = vadd.f32 %v932, %v1012
  %v1020 = vxor.u32 %v1016, 2147483648
  %v1021 = vxor.u32 %v1017, 2147483648
  %v1022 = vxor.u32 %v1018, 2147483648
  %v1023 = vmul.f32 %v1020, 1.442695
  %v1024 = vpow.pop %v1023
  %v1025 = vmul.f32 %v1021, 1.442695
  %v1026 = vpow.pop %v1025
  %v1027 = vmul.f32 %v1022, 1.442695
  %v1028 = vpow.pop %v1027
  %v1029 = vadd.f32 %v1024, 1.0
  %v1030 = vadd.f32 %v1026, 1.0
  %v1031 = vadd.f32 %v1028, 1.0
  %v1032 = vrcp.pop %v1029
  %v1033 = vmul.f32 1.0, %v1032
  %v1034 = vrcp.pop %v1030
  %v1035 = vmul.f32 1.0, %v1034
  %v1036 = vrcp.pop %v1031
  %v1037 = vmul.f32 1.0, %v1036
  %v1038 = vtanh.pop %v1019
  %v1039 = vmul.f32 %v1035, %v923
  %v1040 = vmul.f32 %v1033, %v1038
  %v1041 = vadd.f32 %v1039, %v1040
  %v1042 = vtanh.pop %v1041
  %v1043 = vmul.f32 %v1037, %v1042
  %s1044 = scalar_lea.vmem %s4, 48
  %1045 = vst [vmem:[%s1044] sm:$0xff] %v1043
  %s1046 = scalar_lea.vmem %s0, 224
  %v1047 = vld [vmem:[%s1046] sm:$0xff]
  %v1048 = vld [vmem:[%s1046 + $0x8] sm:$0xff]
  %v1049 = vld [vmem:[%s1046 + $0x10] sm:$0xff]
  %v1050 = vld [vmem:[%s1046 + $0x18] sm:$0xff]
  %v1051 = vpack.c.bf16 %v1043, %v1043
  %1052 = vmatprep.subr.bf16.mxu0 %v164
  %1053 = vmatpush1.bf16.msra.mxu0 %v163
  %1054 = vmatprep.subr.bf16.mxu0 %v168
  %1055 = vmatpush1.bf16.msra.mxu0 %v167
  %1056 = vmatprep.subr.bf16.mxu0 %v172
  %1057 = vmatpush1.bf16.msra.mxu0 %v171
  %1058 = vmatprep.subr.bf16.mxu0 %v176
  %1059 = vmatpush1.bf16.msra.mxu0 %v175
  %1060 = vmatprep.subr.bf16.mxu0 %v180
  %1061 = vmatpush1.bf16.msra.mxu0 %v179
  %1062 = vmatprep.subr.bf16.mxu0 %v184
  %1063 = vmatpush1.bf16.msra.mxu0 %v183
  %1064 = vmatprep.subr.bf16.mxu0 %v188
  %1065 = vmatpush1.bf16.msra.mxu0 %v187
  %1066 = vmatprep.subr.bf16.mxu0 %v192
  %1067 = vmatpush1.bf16.msra.mxu0 %v191
  %1068 = vmatprep.subr.bf16.mxu0 0
  %1069 = vmatpush1.bf16.msra.mxu0 0
  %1070 = vmatprep.subr.bf16.mxu0 0
  %1071 = vmatpush1.bf16.msra.mxu0 0
  %1072 = vmatprep.subr.bf16.mxu0 0
  %1073 = vmatpush1.bf16.msra.mxu0 0
  %1074 = vmatprep.subr.bf16.mxu0 0
  %1075 = vmatpush1.bf16.msra.mxu0 0
  %1076 = vmatprep.subr.bf16.mxu0 0
  %1077 = vmatpush1.bf16.msra.mxu0 0
  %1078 = vmatprep.subr.bf16.mxu0 0
  %1079 = vmatpush1.bf16.msra.mxu0 0
  %1080 = vmatprep.subr.bf16.mxu0 0
  %1081 = vmatpush1.bf16.msra.mxu0 0
  %1082 = vmatprep.subr.bf16.mxu0 0
  %1083 = vmatpush1.bf16.msra.mxu0 0
  %1084 = vmatprep.mubr.bf16.mxu0 0
  %1085 = vmatmul.mubr.bf16.gmra.mrb[0].mxu0 %v1051
  %v1086 = vpop.f32.mrb[0].mxu0
  %v1087 = vadd.f32 0.0, %v1086
  %v1088 = vpop.f32.mrb[0].mxu0
  %v1089 = vadd.f32 0.0, %v1088
  %v1090 = vpop.f32.mrb[0].mxu0
  %v1091 = vpop.f32.mrb[0].mxu0
  %1092 = vdwg.mxu0
  %1093 = vmatprep.subr.bf16.mxu0 %v166
  %1094 = vmatpush1.bf16.msra.mxu0 %v165
  %1095 = vmatprep.subr.bf16.mxu0 %v170
  %1096 = vmatpush1.bf16.msra.mxu0 %v169
  %1097 = vmatprep.subr.bf16.mxu0 %v174
  %1098 = vmatpush1.bf16.msra.mxu0 %v173
  %1099 = vmatprep.subr.bf16.mxu0 %v178
  %1100 = vmatpush1.bf16.msra.mxu0 %v177
  %1101 = vmatprep.subr.bf16.mxu0 %v182
  %1102 = vmatpush1.bf16.msra.mxu0 %v181
  %1103 = vmatprep.subr.bf16.mxu0 %v186
  %1104 = vmatpush1.bf16.msra.mxu0 %v185
  %1105 = vmatprep.subr.bf16.mxu0 %v190
  %1106 = vmatpush1.bf16.msra.mxu0 %v189
  %1107 = vmatprep.subr.bf16.mxu0 %v194
  %1108 = vmatpush1.bf16.msra.mxu0 %v193
  %1109 = vmatprep.subr.bf16.mxu0 0
  %1110 = vmatpush1.bf16.msra.mxu0 0
  %1111 = vmatprep.subr.bf16.mxu0 0
  %1112 = vmatpush1.bf16.msra.mxu0 0
  %1113 = vmatprep.subr.bf16.mxu0 0
  %1114 = vmatpush1.bf16.msra.mxu0 0
  %1115 = vmatprep.subr.bf16.mxu0 0
  %1116 = vmatpush1.bf16.msra.mxu0 0
  %1117 = vmatprep.subr.bf16.mxu0 0
  %1118 = vmatpush1.bf16.msra.mxu0 0
  %1119 = vmatprep.subr.bf16.mxu0 0
  %1120 = vmatpush1.bf16.msra.mxu0 0
  %1121 = vmatprep.subr.bf16.mxu0 0
  %1122 = vmatpush1.bf16.msra.mxu0 0
  %1123 = vmatprep.subr.bf16.mxu0 0
  %1124 = vmatpush1.bf16.msra.mxu0 0
  %1125 = vmatprep.mubr.bf16.mxu0 0
  %1126 = vmatmul.mubr.bf16.gmra.mrb[0].mxu0 %v1051
  %v1127 = vpop.f32.mrb[0].mxu0
  %v1128 = vadd.f32 0.0, %v1127
  %v1129 = vpop.f32.mrb[0].mxu0
  %v1130 = vadd.f32 0.0, %v1129
  %v1131 = vpop.f32.mrb[0].mxu0
  %v1132 = vpop.f32.mrb[0].mxu0
  %1133 = vdwg.mxu0
  %v1134 = vadd.f32 %v1047, %v1087
  %v1135 = vadd.f32 %v1048, %v1089
  %v1136 = vadd.f32 %v1049, %v1128
  %v1137 = vadd.f32 %v1050, %v1130
  %v1138 = vxor.u32 %v1134, 2147483648
  %v1139 = vxor.u32 %v1135, 2147483648
  %v1140 = vxor.u32 %v1136, 2147483648
  %v1141 = vmul.f32 %v1138, 1.442695
  %v1142 = vpow.pop %v1141
  %v1143 = vmul.f32 %v1139, 1.442695
  %v1144 = vpow.pop %v1143
  %v1145 = vmul.f32 %v1140, 1.442695
  %v1146 = vpow.pop %v1145
  %v1147 = vadd.f32 %v1142, 1.0
  %v1148 = vadd.f32 %v1144, 1.0
  %v1149 = vadd.f32 %v1146, 1.0
  %v1150 = vrcp.pop %v1147
  %v1151 = vmul.f32 1.0, %v1150
  %v1152 = vrcp.pop %v1148
  %v1153 = vmul.f32 1.0, %v1152
  %v1154 = vrcp.pop %v1149
  %v1155 = vmul.f32 1.0, %v1154
  %v1156 = vtanh.pop %v1137
  %v1157 = vmul.f32 %v1153, %v1041
  %v1158 = vmul.f32 %v1151, %v1156
  %v1159 = vadd.f32 %v1157, %v1158
  %v1160 = vtanh.pop %v1159
  %v1161 = vmul.f32 %v1155, %v1160
  %s1162 = scalar_lea.vmem %s4, 56
  %1163 = vst [vmem:[%s1162] sm:$0xff] %v1161
  %1164 = vst [vmem:[#allocation2] sm:$0xff] %v1161
  %1165 = vst [vmem:[#allocation3] sm:$0xff] %v1159
  // Predicated region
  $region22: #{lstm_forward.2} parent=0 // pred_check
    %p1166 = pneg %p20
  $region23: #{lstm_forward.2} parent=0 // pred_check_branch
    %1168 = sbr.rel (%p1166) target = $region25
  $region24: #{lstm_forward.2} parent=0 // pred_region
    %1169 = vst [vmem:[%s5] sm:$0xff] %v1159
  $region25: #{lstm_forward.2} parent=0 // pred_fallthru
    _
  // Predicated region
  $region26: #{lstm_forward.2} parent=0 // pred_check
    _
  $region27: #{lstm_forward.2} parent=0 // pred_check_branch
    %1171 = sbr.rel (0) target = $region29
  $region28: #{lstm_forward.2} parent=0 // pred_region
    _
  $region29: #{lstm_forward.2} parent=0 // pred_fallthru
    _
  // Predicated region
  $region30: #{lstm_forward.2} parent=0 // pred_check
    _
  $region31: #{lstm_forward.2} parent=0 // pred_check_branch
    %1173 = sbr.rel (0) target = $region33
  $region32: #{lstm_forward.2} parent=0 // pred_region
    _
  $region33: #{lstm_forward.2} parent=0 // pred_fallthru
    _
  // Predicated region
  $region34: #{lstm_forward.2} parent=0 // pred_check
    _
  $region35: #{lstm_forward.2} parent=0 // pred_check_branch
    %1175 = sbr.rel (0) target = $region37
  $region36: #{lstm_forward.2} parent=0 // pred_region
    _
  $region37: #{lstm_forward.2} parent=0 // pred_fallthru
    _
  // Predicated region
  $region38: #{lstm_forward.2} parent=0 // pred_check
    _
  $region39: #{lstm_forward.2} parent=0 // pred_check_branch
    %1177 = sbr.rel (0) target = $region41
  $region40: #{lstm_forward.2} parent=0 // pred_region
    _
  $region41: #{lstm_forward.2} parent=0 // pred_fallthru
    _

</llo_original>
